<compile_context>
chip_gen: v7x
topology: tpu7x:2x2x1
jax: 0.10.0
libtpu: 0.0.40
codegen_flags: <defaults>
</compile_context>

<pallas_src>
import numpy as np
import jax
import jax.numpy as jnp
from jax.experimental import pallas as pl
from jax.experimental.pallas import tpu as pltpu


def _round_up(n, m):
    return ((n + m - 1) // m) * m


# ----------------------------- Pallas kernel --------------------------------
def _fused_kernel(x_ref, s_ref, tgt_ref, tmask_ref, tbl_ref, w2_ref, b2_ref,
                  w3_ref, b3_ref, o_ref):
    """Feature-major fused forward for one batch tile.

    Shapes (R = design rows, FP = padded feature count, TB = batch tile):
      x_ref     (FP, TB)  raw features, feature-major (9 ids + time, zero-padded)
      s_ref     (R,  FP)  static scatter matrix (routes feature c to its rows)
      tgt_ref   (R,  1)   per-row match target (local id); NaN => never match
      tmask_ref (R,  1)   1.0 only on the time row (pass-through)
      tbl_ref   (H1, R)   folded table^T: [E_t @ W1_t | w1_time | b1]^T
      w2_ref    (H2P,H1)  W2^T zero-padded to 8 rows
      b2_ref    (H2P,1)   b2 column (zero-padded)
      w3_ref    (H2P,1)   W3 column (zero-padded)
      b3_ref    (1,  1)   scalar bias (SMEM)
      o_ref     (1,  TB)  lane-dense sigmoid output
    """
    xT = x_ref[...]                                               # (FP, TB)

    # In-kernel "gather" on the MXU: gathered[r, b] = id of the category owning
    # design row r; time value on the time row; 0.0 on the bias row.
    gathered = jnp.dot(s_ref[...], xT,
                       preferred_element_type=jnp.float32)        # (R, TB)

    # One compare + one select builds the whole design matrix [onehot | t | 1]:
    #   embedding rows: 1.0 where the local id matches, else 0.0
    #   time row:       target is NaN (never matches) -> gathered * 1 = t
    #   bias row:       gathered == 0 == target        -> 1.0
    design = jnp.where(gathered == tgt_ref[...], 1.0,
                       gathered * tmask_ref[...])                 # (R, TB)

    # Layer 1 (embeddings + time + b1 all folded into one matmul) + ReLU.
    h1 = jnp.dot(tbl_ref[...], design,
                 preferred_element_type=jnp.float32)              # (16, TB)
    h1 = jnp.maximum(h1, 0.0)
    # Dropout(0.1) -> identity in eval mode

    # Layer 2: Linear(16 -> 4) + ReLU, zero-padded to 8 output rows.
    h2 = jnp.dot(w2_ref[...], h1,
                 preferred_element_type=jnp.float32) + b2_ref[...]
    h2 = jnp.maximum(h2, 0.0)                                     # (8, TB)
    # Dropout(0.1) -> identity in eval mode

    # Layer 3: Linear(4 -> 1) as a sublane reduction + Sigmoid (EUP reciprocal).
    logit = jnp.sum(h2 * w3_ref[...], axis=0, keepdims=True) + b3_ref[0, 0]
    o_ref[...] = pl.reciprocal(1.0 + jnp.exp(-logit), approx=True)   # (1, TB)


def run_fused_mlp(x, consts, *, tb=4096):
    """x: (B, 10) f32 -> (B,) f32 sigmoid scores."""
    s_t, tgt, tmask, tbl_t, w2_t, b2_col, w3_col, b3 = consts
    B, F = x.shape
    R, FP = s_t.shape
    H1 = tbl_t.shape[0]
    H2P = w2_t.shape[0]

    # Lane-aligned batch tile (multiple of 128), clamped to the padded batch.
    tb = min(max(int(tb), 128), _round_up(B, 128))
    tb = _round_up(tb, 128)
    Bp = _round_up(B, tb)

    # Pad features 10 -> FP (zero rows of the scatter matrix ignore them), pad the
    # batch to a tile multiple (id 0 / time 0 rows, sliced off below), transpose to
    # feature-major so the kernel output is lane-dense.
    xT = jnp.pad(x, ((0, Bp - B), (0, FP - F))).T                 # (FP, Bp)

    const = lambda i: (0, 0)
    out = pl.pallas_call(
        _fused_kernel,
        out_shape=jax.ShapeDtypeStruct((1, Bp), jnp.float32),
        grid=(Bp // tb,),
        in_specs=[
            pl.BlockSpec((FP, tb), lambda i: (0, i)),             # streamed features
            pl.BlockSpec((R, FP), const),                         # scatter matrix
            pl.BlockSpec((R, 1), const),                          # match targets
            pl.BlockSpec((R, 1), const),                          # time-row mask
            pl.BlockSpec((H1, R), const),                         # folded table^T
            pl.BlockSpec((H2P, H1), const),                       # W2^T (padded)
            pl.BlockSpec((H2P, 1), const),                        # b2 column
            pl.BlockSpec((H2P, 1), const),                        # W3 column
            pl.BlockSpec(memory_space=pltpu.MemorySpace.SMEM),    # b3 scalar
        ],
        out_specs=pl.BlockSpec((1, tb), lambda i: (0, i)),        # lane-dense store
        compiler_params=pltpu.CompilerParams(
            dimension_semantics=("parallel",),                    # megacore on v7x
        ),
    )(xT, s_t, tgt, tmask, tbl_t, w2_t, b2_col, w3_col, b3)
    return out.reshape(-1)[:B]


# ----------------------------- Model (glue) ---------------------------------
class DeepRecModelPallas:
    def __init__(self, num_embeddings, embedding_dims, key):
        keys = jax.random.split(key, 16)
        k = iter(keys)
        hp = jax.lax.Precision.HIGHEST

        def emb(num, dim):
            # nn.Embedding default init: N(0, 1)
            return jax.random.normal(next(k), (num, dim), dtype=jnp.float32)

        self.user_emb = emb(num_embeddings['user_id'] + 1, 8)
        self.product_emb = emb(num_embeddings['product_id'] + 1, 8)
        self.model_emb = emb(num_embeddings['model_id'] + 1, 8)
        self.gender_emb = emb(num_embeddings['gender'] + 1, 2)
        self.age_emb = emb(num_embeddings['age_group'] + 1, 4)
        self.residence_emb = emb(num_embeddings['residence_type'] + 1, 3)
        self.color_emb = emb(embedding_dims['색상'] + 1, embedding_dims['색상'])
        self.size_emb = emb(embedding_dims['사이즈'] + 1, embedding_dims['사이즈'])
        self.material_emb = emb(embedding_dims['소재'] + 1, embedding_dims['소재'])

        total_input_dim = (8 * 3 + 2 + 4 + 3
                           + embedding_dims['색상']
                           + embedding_dims['사이즈']
                           + embedding_dims['소재'] + 1)

        def linear(fan_in, fan_out):
            # nn.Linear default init: U(-1/sqrt(fan_in), 1/sqrt(fan_in))
            bound = 1.0 / jnp.sqrt(jnp.float32(fan_in))
            w = jax.random.uniform(next(k), (fan_in, fan_out),
                                   minval=-bound, maxval=bound, dtype=jnp.float32)
            b = jax.random.uniform(next(k), (1, fan_out),
                                   minval=-bound, maxval=bound, dtype=jnp.float32)
            return w, b

        self.w1, self.b1 = linear(total_input_dim, 16)
        self.w2, self.b2 = linear(16, 4)
        self.w3, self.b3 = linear(4, 1)

        # ---- offline folding:  per-table  T_t = E_t @ W1[rows_t]  (rows_t, 16) ----
        tables = [self.user_emb, self.product_emb, self.model_emb,
                  self.gender_emb, self.age_emb, self.residence_emb,
                  self.color_emb, self.size_emb, self.material_emb]
        dims = [8, 8, 8, 2, 4, 3,
                embedding_dims['색상'], embedding_dims['사이즈'],
                embedding_dims['소재']]

        proj, row_offsets = [], []
        row_off, col_off = 0, 0
        for E, d in zip(tables, dims):
            proj.append(jnp.dot(E, self.w1[col_off:col_off + d, :], precision=hp))
            row_offsets.append(row_off)
            row_off += E.shape[0]
            col_off += d
        n_emb_rows = row_off                          # 62 for the test config
        w1_time = self.w1[col_off:col_off + 1, :]     # (1, 16)
        time_row, bias_row = n_emb_rows, n_emb_rows + 1
        R = _round_up(n_emb_rows + 2, 8)              # 64 for the test config
        FP = 16                                       # 10 features padded to 16

        fused = jnp.concatenate(proj + [w1_time, self.b1], axis=0)
        fused = jnp.pad(fused, ((0, R - fused.shape[0]), (0, 0)))
        self.tbl_t = fused.T                          # (16, R) folded table^T

        # Static scatter matrix / compare targets / time mask.
        s = np.zeros((R, FP), dtype=np.float32)
        tgt = np.full((R, 1), np.nan, dtype=np.float32)   # NaN == x is always False
        tmask = np.zeros((R, 1), dtype=np.float32)
        for c, (E, off) in enumerate(zip(tables, row_offsets)):
            rows = E.shape[0]
            s[off:off + rows, c] = 1.0
            tgt[off:off + rows, 0] = np.arange(rows, dtype=np.float32)
        s[time_row, 9] = 1.0          # feature column 9 (time) feeds the time row
        tmask[time_row, 0] = 1.0      # pass the time value through the select
        tgt[bias_row, 0] = 0.0        # gathered == 0 there -> constant 1.0 (bias)
        self.s_t = jnp.asarray(s)
        self.tgt = jnp.asarray(tgt)
        self.tmask = jnp.asarray(tmask)

        # Layer 2/3 parameters, feature-major, zero-padded to 8 sublanes.
        H2P = 8
        self.w2_t = jnp.zeros((H2P, 16), jnp.float32).at[:4].set(self.w2.T)
        self.b2_col = jnp.zeros((H2P, 1), jnp.float32).at[:4, 0].set(self.b2[0])
        self.w3_col = jnp.zeros((H2P, 1), jnp.float32).at[:4, 0].set(self.w3[:, 0])
        self.b3_s = self.b3.reshape(1, 1)

    def _consts(self):
        return (self.s_t, self.tgt, self.tmask, self.tbl_t, self.w2_t,
                self.b2_col, self.w3_col, self.b3_s)

    def __call__(self, x, *, tb=4096):
        # x: (B, 10) f32 — cols 0..8 integer-valued categorical ids, col 9 time.
        # Returns (B,) — matches PyTorch .squeeze() for B > 1.
        return run_fused_mlp(x, self._consts(), tb=tb)


# ------------------------------- Reference ----------------------------------
def reference_forward(model, x):
    """Pure-JAX reference of the same forward (eval-mode dropout), UNFUSED."""
    hp = jax.lax.Precision.HIGHEST
    uid = x[:, 0].astype(jnp.int32); pid = x[:, 1].astype(jnp.int32)
    mid = x[:, 2].astype(jnp.int32); gender = x[:, 3].astype(jnp.int32)
    age = x[:, 4].astype(jnp.int32); res = x[:, 5].astype(jnp.int32)
    color = x[:, 6].astype(jnp.int32); size = x[:, 7].astype(jnp.int32)
    mat = x[:, 8].astype(jnp.int32); time = x[:, 9:10]
    feats = jnp.concatenate([
        model.user_emb[uid], model.product_emb[pid], model.model_emb[mid],
        model.gender_emb[gender], model.age_emb[age], model.residence_emb[res],
        model.color_emb[color], model.size_emb[size], model.material_emb[mat],
        time], axis=-1)
    h1 = jnp.maximum(jnp.dot(feats, model.w1, precision=hp) + model.b1, 0.0)
    h2 = jnp.maximum(jnp.dot(h1, model.w2, precision=hp) + model.b2, 0.0)
    logit = jnp.dot(h2, model.w3, precision=hp) + model.b3
    return jnp.squeeze(jax.nn.sigmoid(logit), axis=-1)


# --------------------------------- Main --------------------------------------
if __name__ == "__main__":
    key = jax.random.PRNGKey(0)
    k_model, k_idx, k_time, k_idx2, k_time2 = jax.random.split(key, 5)

    num_embeddings = {
        'user_id': 10, 'product_id': 12, 'model_id': 9,
        'gender': 2, 'age_group': 5, 'residence_type': 3,
    }
    embedding_dims = {'색상': 4, '사이즈': 3, '소재': 5}

    model = DeepRecModelPallas(num_embeddings, embedding_dims, k_model)

    maxes = jnp.array([
        num_embeddings['user_id'], num_embeddings['product_id'],
        num_embeddings['model_id'], num_embeddings['gender'],
        num_embeddings['age_group'], num_embeddings['residence_type'],
        embedding_dims['색상'], embedding_dims['사이즈'], embedding_dims['소재'],
    ], dtype=jnp.int32)

    # --- main check: B = 1024 at the default (large) tile -> single grid step ---
    B = 1024
    idx = jax.random.randint(k_idx, (B, 9), 0, 1_000_000) % (maxes + 1)
    time_feat = jax.random.uniform(k_time, (B, 1), dtype=jnp.float32)
    x = jnp.concatenate([idx.astype(jnp.float32), time_feat], axis=-1)  # (B, 10)

    ref = jax.block_until_ready(reference_forward(model, x))
    out = jax.block_until_ready(model(x))
    assert out.shape == (B,), out.shape
    # approx-EUP reciprocal + matmul rounding -> 2e-3 tolerance
    assert jnp.allclose(out, ref, atol=2e-3), float(jnp.max(jnp.abs(out - ref)))

    # --- multi-step pipelined grid: TB = 256 -> 4 grid steps --------------------
    out_ms = jax.block_until_ready(model(x, tb=256))
    assert out_ms.shape == (B,), out_ms.shape
    assert jnp.allclose(out_ms, ref, atol=2e-3), float(jnp.max(jnp.abs(out_ms - ref)))

    # --- padding path: B not a multiple of 128, default tile clamped ------------
    B2 = 37
    idx2 = jax.random.randint(k_idx2, (B2, 9), 0, 1_000_000) % (maxes + 1)
    time2 = jax.random.uniform(k_time2, (B2, 1), dtype=jnp.float32)
    x2 = jnp.concatenate([idx2.astype(jnp.float32), time2], axis=-1)
    out2 = jax.block_until_ready(model(x2))
    ref2 = jax.block_until_ready(reference_forward(model, x2))
    assert out2.shape == (B2,), out2.shape
    assert jnp.allclose(out2, ref2, atol=2e-3), float(jnp.max(jnp.abs(out2 - ref2)))

    print("KERNEL_OK")
</pallas_src>

<mosaic_0001>
module attributes {stable_mosaic.version = 11 : i64} {
  func.func @_fused_kernel(%arg0: i32, %arg1: memref<16x1024xf32, #tpu.memory_space<vmem>>, %arg2: memref<64x16xf32, #tpu.memory_space<vmem>>, %arg3: memref<64x1xf32, #tpu.memory_space<vmem>>, %arg4: memref<64x1xf32, #tpu.memory_space<vmem>>, %arg5: memref<16x64xf32, #tpu.memory_space<vmem>>, %arg6: memref<8x16xf32, #tpu.memory_space<vmem>>, %arg7: memref<8x1xf32, #tpu.memory_space<vmem>>, %arg8: memref<8x1xf32, #tpu.memory_space<vmem>>, %arg9: memref<1x1xf32, #tpu.memory_space<smem>>, %arg10: memref<1x1024xf32, #tpu.memory_space<vmem>>) attributes {dimension_semantics = [#tpu.dimension_semantics<parallel>], iteration_bounds = array<i64: 1>, scalar_prefetch = 0 : i64, scratch_operands = 0 : i64, tpu.core_type = #tpu.core_type<tc>, window_params = [{transform_indices = @transform_0, window_bounds = array<i64: 16, 1024>}, {pipeline_mode = #tpu.pipeline_mode<synchronous>, transform_indices = @transform_1, window_bounds = array<i64: 64, 16>}, {pipeline_mode = #tpu.pipeline_mode<synchronous>, transform_indices = @transform_2, window_bounds = array<i64: 64, 1>}, {pipeline_mode = #tpu.pipeline_mode<synchronous>, transform_indices = @transform_3, window_bounds = array<i64: 64, 1>}, {pipeline_mode = #tpu.pipeline_mode<synchronous>, transform_indices = @transform_4, window_bounds = array<i64: 16, 64>}, {pipeline_mode = #tpu.pipeline_mode<synchronous>, transform_indices = @transform_5, window_bounds = array<i64: 8, 16>}, {pipeline_mode = #tpu.pipeline_mode<synchronous>, transform_indices = @transform_6, window_bounds = array<i64: 8, 1>}, {pipeline_mode = #tpu.pipeline_mode<synchronous>, transform_indices = @transform_7, window_bounds = array<i64: 8, 1>}, {transform_indices = @transform_8, window_bounds = array<i64: 1, 1>}, {transform_indices = @transform_9, window_bounds = array<i64: 1, 1024>}]} {
    %c0 = arith.constant 0 : index
    %c0_0 = arith.constant 0 : index
    %0 = vector.load %arg1[%c0, %c0_0] : memref<16x1024xf32, #tpu.memory_space<vmem>>, vector<16x1024xf32>
    %c0_1 = arith.constant 0 : index
    %c0_2 = arith.constant 0 : index
    %1 = vector.load %arg2[%c0_1, %c0_2] : memref<64x16xf32, #tpu.memory_space<vmem>>, vector<64x16xf32>
    %cst = arith.constant dense<0.000000e+00> : vector<64x1024xf32>
    %2 = tpu.matmul %1, %0, %cst {dimension_numbers = #tpu.dot_dimension_numbers<[1], [0], [0], [1], [0, 0, 1, 1], [], []>} : vector<64x16xf32>, vector<16x1024xf32>, vector<64x1024xf32> -> vector<64x1024xf32>
    %c0_3 = arith.constant 0 : index
    %c0_4 = arith.constant 0 : index
    %3 = vector.load %arg3[%c0_3, %c0_4] : memref<64x1xf32, #tpu.memory_space<vmem>>, vector<64x1xf32>
    %4 = vector.broadcast %3 : vector<64x1xf32> to vector<64x1024xf32>
    %5 = arith.cmpf oeq, %2, %4 : vector<64x1024xf32>
    %c0_5 = arith.constant 0 : index
    %c0_6 = arith.constant 0 : index
    %6 = vector.load %arg4[%c0_5, %c0_6] : memref<64x1xf32, #tpu.memory_space<vmem>>, vector<64x1xf32>
    %7 = vector.broadcast %6 : vector<64x1xf32> to vector<64x1024xf32>
    %8 = arith.mulf %2, %7 : vector<64x1024xf32>
    %cst_7 = arith.constant 1.000000e+00 : f32
    %9 = vector.broadcast %cst_7 : f32 to vector<64x1024xf32>
    %10 = arith.select %5, %9, %8 : vector<64x1024xi1>, vector<64x1024xf32>
    %c0_8 = arith.constant 0 : index
    %c0_9 = arith.constant 0 : index
    %11 = vector.load %arg5[%c0_8, %c0_9] : memref<16x64xf32, #tpu.memory_space<vmem>>, vector<16x64xf32>
    %cst_10 = arith.constant dense<0.000000e+00> : vector<16x1024xf32>
    %12 = tpu.matmul %11, %10, %cst_10 {dimension_numbers = #tpu.dot_dimension_numbers<[1], [0], [0], [1], [0, 0, 1, 1], [], []>} : vector<16x64xf32>, vector<64x1024xf32>, vector<16x1024xf32> -> vector<16x1024xf32>
    %cst_11 = arith.constant 0.000000e+00 : f32
    %13 = vector.broadcast %cst_11 : f32 to vector<16x1024xf32>
    %14 = arith.maximumf %12, %13 : vector<16x1024xf32>
    %c0_12 = arith.constant 0 : index
    %c0_13 = arith.constant 0 : index
    %15 = vector.load %arg6[%c0_12, %c0_13] : memref<8x16xf32, #tpu.memory_space<vmem>>, vector<8x16xf32>
    %cst_14 = arith.constant dense<0.000000e+00> : vector<8x1024xf32>
    %16 = tpu.matmul %15, %14, %cst_14 {dimension_numbers = #tpu.dot_dimension_numbers<[1], [0], [0], [1], [0, 0, 1, 1], [], []>} : vector<8x16xf32>, vector<16x1024xf32>, vector<8x1024xf32> -> vector<8x1024xf32>
    %c0_15 = arith.constant 0 : index
    %c0_16 = arith.constant 0 : index
    %17 = vector.load %arg7[%c0_15, %c0_16] : memref<8x1xf32, #tpu.memory_space<vmem>>, vector<8x1xf32>
    %18 = vector.broadcast %17 : vector<8x1xf32> to vector<8x1024xf32>
    %19 = arith.addf %16, %18 : vector<8x1024xf32>
    %cst_17 = arith.constant 0.000000e+00 : f32
    %20 = vector.broadcast %cst_17 : f32 to vector<8x1024xf32>
    %21 = arith.maximumf %19, %20 : vector<8x1024xf32>
    %c0_18 = arith.constant 0 : index
    %c0_19 = arith.constant 0 : index
    %22 = vector.load %arg8[%c0_18, %c0_19] : memref<8x1xf32, #tpu.memory_space<vmem>>, vector<8x1xf32>
    %23 = vector.broadcast %22 : vector<8x1xf32> to vector<8x1024xf32>
    %24 = arith.mulf %21, %23 : vector<8x1024xf32>
    %cst_20 = arith.constant dense<0.000000e+00> : vector<1024xf32>
    %25 = vector.multi_reduction <add>, %24, %cst_20 [0] : vector<8x1024xf32> to vector<1024xf32>
    %26 = vector.shape_cast %25 : vector<1024xf32> to vector<1x1024xf32>
    %c0_21 = arith.constant 0 : index
    %c0_22 = arith.constant 0 : index
    %27 = memref.load %arg9[%c0_21, %c0_22] : memref<1x1xf32, #tpu.memory_space<smem>>
    %28 = vector.broadcast %27 : f32 to vector<1x1024xf32>
    %29 = arith.addf %26, %28 : vector<1x1024xf32>
    %cst_23 = arith.constant 0.000000e+00 : f32
    %30 = vector.broadcast %cst_23 : f32 to vector<1x1024xf32>
    %31 = arith.subf %30, %29 : vector<1x1024xf32>
    %32 = math.exp %31 : vector<1x1024xf32>
    %cst_24 = arith.constant 1.000000e+00 : f32
    %33 = vector.broadcast %cst_24 : f32 to vector<1x1024xf32>
    %34 = arith.addf %33, %32 : vector<1x1024xf32>
    %35 = tpu.reciprocal %34 {approx = true} : vector<1x1024xf32> -> vector<1x1024xf32>
    %c0_25 = arith.constant 0 : index
    %c0_26 = arith.constant 0 : index
    %36 = vector.load %arg10[%c0_25, %c0_26] : memref<1x1024xf32, #tpu.memory_space<vmem>>, vector<1x1024xf32>
    tpu.vector_store %arg10[%c0_25, %c0_26], %35 {strides = array<i32>} : memref<1x1024xf32, #tpu.memory_space<vmem>>, vector<1x1024xf32>,
    return
  }
  func.func @transform_0(%arg0: i32) -> (i32, i32) {
    %c0_i32 = arith.constant 0 : i32
    %c0_i32_0 = arith.constant 0 : i32
    return %c0_i32, %arg0 : i32, i32
  }
  func.func @transform_1(%arg0: i32) -> (i32, i32) {
    %c0_i32 = arith.constant 0 : i32
    %c0_i32_0 = arith.constant 0 : i32
    %c0_i32_1 = arith.constant 0 : i32
    return %c0_i32, %c0_i32_0 : i32, i32
  }
  func.func @transform_2(%arg0: i32) -> (i32, i32) {
    %c0_i32 = arith.constant 0 : i32
    %c0_i32_0 = arith.constant 0 : i32
    %c0_i32_1 = arith.constant 0 : i32
    return %c0_i32, %c0_i32_0 : i32, i32
  }
  func.func @transform_3(%arg0: i32) -> (i32, i32) {
    %c0_i32 = arith.constant 0 : i32
    %c0_i32_0 = arith.constant 0 : i32
    %c0_i32_1 = arith.constant 0 : i32
    return %c0_i32, %c0_i32_0 : i32, i32
  }
  func.func @transform_4(%arg0: i32) -> (i32, i32) {
    %c0_i32 = arith.constant 0 : i32
    %c0_i32_0 = arith.constant 0 : i32
    %c0_i32_1 = arith.constant 0 : i32
    return %c0_i32, %c0_i32_0 : i32, i32
  }
  func.func @transform_5(%arg0: i32) -> (i32, i32) {
    %c0_i32 = arith.constant 0 : i32
    %c0_i32_0 = arith.constant 0 : i32
    %c0_i32_1 = arith.constant 0 : i32
    return %c0_i32, %c0_i32_0 : i32, i32
  }
  func.func @transform_6(%arg0: i32) -> (i32, i32) {
    %c0_i32 = arith.constant 0 : i32
    %c0_i32_0 = arith.constant 0 : i32
    %c0_i32_1 = arith.constant 0 : i32
    return %c0_i32, %c0_i32_0 : i32, i32
  }
  func.func @transform_7(%arg0: i32) -> (i32, i32) {
    %c0_i32 = arith.constant 0 : i32
    %c0_i32_0 = arith.constant 0 : i32
    %c0_i32_1 = arith.constant 0 : i32
    return %c0_i32, %c0_i32_0 : i32, i32
  }
  func.func @transform_8(%arg0: i32) -> (i32, i32) {
    %c0_i32 = arith.constant 0 : i32
    %c0_i32_0 = arith.constant 0 : i32
    %c0_i32_1 = arith.constant 0 : i32
    return %c0_i32, %c0_i32_0 : i32, i32
  }
  func.func @transform_9(%arg0: i32) -> (i32, i32) {
    %c0_i32 = arith.constant 0 : i32
    %c0_i32_0 = arith.constant 0 : i32
    return %c0_i32, %arg0 : i32, i32
  }
}

</mosaic_0001>

<llo_original>
// kernel: tpu_custom_call.1
$region0: #{tpu_custom_call.1}
  #allocation0 [shape = 'u32[]', space=smem, size = 0x4, offset = 0x4, fixed_abs, tag = 'smem constant byte address 0x4 - core index']
  #allocation1 [shape = 'u32[144,128]{1,0:T(1,128)}', space=vmem, size = 0x12000, scoped, tag = 'internal scratch']
  #allocation2 [shape = 'f32[1,1]{1,0:T(1,128)S(6)}', space=smem, size = 0x200, scoped, tag = 'scoped memory for tpu_custom_call.1']
  %s0 = inlined_call_operand.vmem [shape: f32[16,1024], index: 0, kind: input, shape index: {}]
  %s1 = inlined_call_operand.vmem [shape: f32[64,16], index: 1, kind: input, shape index: {}]
  %s2 = inlined_call_operand.vmem [shape: f32[64,1], index: 2, kind: input, shape index: {}]
  %s3 = inlined_call_operand.vmem [shape: f32[64,1], index: 3, kind: input, shape index: {}]
  %s4 = inlined_call_operand.vmem [shape: f32[16,64], index: 4, kind: input, shape index: {}]
  %s5 = inlined_call_operand.vmem [shape: f32[8,16], index: 5, kind: input, shape index: {}]
  %s6 = inlined_call_operand.vmem [shape: f32[8,1], index: 6, kind: input, shape index: {}]
  %s7 = inlined_call_operand.vmem [shape: f32[8,1], index: 7, kind: input, shape index: {}]
  %s8 = inlined_call_operand.<no memory space> [shape: f32[1,1], index: 8, kind: input, shape index: {}]
  %s9 = inlined_call_operand.hbm [shape: f32[1,1024], index: 9, kind: output, shape index: {}]
  %s10 = sld [smem:[#allocation0]]
  $region46: #{tpu_custom_call.1} parent=0
    _
  %s12 = ssub.s32 1, %s10
  %s13 = scalar_select 0, %s12, %s10
  %14 = sst [smem:[#allocation2]] %s8
  $region1: #{tpu_custom_call.1} parent=0
    #allocation3 [shape = 'u8[4096]{0}', space=vmem, size = 0x1000, scoped, tag = 'output window, operand 0, single buffered']
    #allocation4 [shape = 's32[1]{0}', space=sflag, size = 0x4, scoped, tag = 'scoped memory for tpu_custom_call.1']
    %15 = vsyncpa [#allocation4], 0
    // Predicated region
    $region2: #{tpu_custom_call.1} parent=1 // pred_check
      _
    $region3: #{tpu_custom_call.1} parent=1 // pred_check_branch
      %17 = sbr.rel (0) target = $region5
    $region4: #{tpu_custom_call.1} parent=1 // pred_region
      _
    $region5: #{tpu_custom_call.1} parent=1 // pred_fallthru
      _
    // Predicated region
    $region6: #{tpu_custom_call.1} parent=1 // pred_check
      _
    $region7: #{tpu_custom_call.1} parent=1 // pred_check_branch
      %19 = sbr.rel (0) target = $region9
    $region8: #{tpu_custom_call.1} parent=1 // pred_region
      _
    $region9: #{tpu_custom_call.1} parent=1 // pred_fallthru
      _
    // Predicated region
    $region10: #{tpu_custom_call.1} parent=1 // pred_check
      _
    $region11: #{tpu_custom_call.1} parent=1 // pred_check_branch
      %21 = sbr.rel (0) target = $region13
    $region12: #{tpu_custom_call.1} parent=1 // pred_region
      _
    $region13: #{tpu_custom_call.1} parent=1 // pred_fallthru
      _
    // Predicated region
    $region14: #{tpu_custom_call.1} parent=1 // pred_check
      _
    $region15: #{tpu_custom_call.1} parent=1 // pred_check_branch
      %23 = sbr.rel (0) target = $region17
    $region16: #{tpu_custom_call.1} parent=1 // pred_region
      _
    $region17: #{tpu_custom_call.1} parent=1 // pred_fallthru
      _
    // Predicated region
    $region18: #{tpu_custom_call.1} parent=1 // pred_check
      _
    $region19: #{tpu_custom_call.1} parent=1 // pred_check_branch
      %25 = sbr.rel (0) target = $region21
    $region20: #{tpu_custom_call.1} parent=1 // pred_region
      _
    $region21: #{tpu_custom_call.1} parent=1 // pred_fallthru
      _
    // Predicated region
    $region22: #{tpu_custom_call.1} parent=1 // pred_check
      _
    $region23: #{tpu_custom_call.1} parent=1 // pred_check_branch
      %27 = sbr.rel (0) target = $region25
    $region24: #{tpu_custom_call.1} parent=1 // pred_region
      _
    $region25: #{tpu_custom_call.1} parent=1 // pred_fallthru
      _
    // Predicated region
    $region26: #{tpu_custom_call.1} parent=1 // pred_check
      _
    $region27: #{tpu_custom_call.1} parent=1 // pred_check_branch
      %29 = sbr.rel (0) target = $region29
    $region28: #{tpu_custom_call.1} parent=1 // pred_region
      _
    $region29: #{tpu_custom_call.1} parent=1 // pred_fallthru
      _
    // Predicated region
    $region30: #{tpu_custom_call.1} parent=1 // pred_check
      _
    $region31: #{tpu_custom_call.1} parent=1 // pred_check_branch
      %31 = sbr.rel (0) target = $region33
    $region32: #{tpu_custom_call.1} parent=1 // pred_region
      _
    $region33: #{tpu_custom_call.1} parent=1 // pred_fallthru
      _
    // Predicated region
    $region34: #{tpu_custom_call.1} parent=1 // pred_check
      _
    $region35: #{tpu_custom_call.1} parent=1 // pred_check_branch
      %33 = sbr.rel (0) target = $region37
    $region36: #{tpu_custom_call.1} parent=1 // pred_region
      _
    $region37: #{tpu_custom_call.1} parent=1 // pred_fallthru
      _
    %v34 = vld [vmem:[%s0] sm:$0xff]
    %v35 = vld [vmem:[%s0 + $0x8] sm:$0xff]
    %v36 = vld [vmem:[%s0 + $0x10] sm:$0xff]
    %v37 = vld [vmem:[%s0 + $0x18] sm:$0xff]
    %v38 = vld [vmem:[%s0 + $0x20] sm:$0xff]
    %v39 = vld [vmem:[%s0 + $0x28] sm:$0xff]
    %v40 = vld [vmem:[%s0 + $0x30] sm:$0xff]
    %v41 = vld [vmem:[%s0 + $0x38] sm:$0xff]
    %v42 = vld [vmem:[%s0 + $0x40] sm:$0xff]
    %v43 = vld [vmem:[%s0 + $0x48] sm:$0xff]
    %v44 = vld [vmem:[%s0 + $0x50] sm:$0xff]
    %v45 = vld [vmem:[%s0 + $0x58] sm:$0xff]
    %v46 = vld [vmem:[%s0 + $0x60] sm:$0xff]
    %v47 = vld [vmem:[%s0 + $0x68] sm:$0xff]
    %v48 = vld [vmem:[%s0 + $0x70] sm:$0xff]
    %v49 = vld [vmem:[%s0 + $0x78] sm:$0xff]
    %v50 = vld [vmem:[%s1] sm:$0xff]
    %v51 = vld [vmem:[%s1 + $0x8] sm:$0xff]
    %v52 = vld [vmem:[%s1 + $0x10] sm:$0xff]
    %v53 = vld [vmem:[%s1 + $0x18] sm:$0xff]
    %v54 = vld [vmem:[%s1 + $0x20] sm:$0xff]
    %v55 = vld [vmem:[%s1 + $0x28] sm:$0xff]
    %v56 = vld [vmem:[%s1 + $0x30] sm:$0xff]
    %v57 = vld [vmem:[%s1 + $0x38] sm:$0xff]
    %vm58 = vcmask 130048
    %v60 = vsel %vm58, %v50, 0
    %v63 = vsel %vm58, %v51, 0
    %v66 = vsel %vm58, %v52, 0
    %v69 = vsel %vm58, %v53, 0
    %v72 = vsel %vm58, %v54, 0
    %v75 = vsel %vm58, %v55, 0
    %v78 = vsel %vm58, %v56, 0
    %v81 = vsel %vm58, %v57, 0
    %83 = vmatprep.subr.mxu0 %v35
    %84 = vmatpush1.msra.mxu0 %v34
    %85 = vmatprep.subr.mxu0 %v43
    %86 = vmatpush1.msra.mxu0 %v42
    %87 = vmatprep.subr.mxu0 0.0
    %88 = vmatpush1.msra.mxu0 0.0
    %89 = vmatprep.subr.mxu0 0.0
    %90 = vmatpush1.msra.mxu0 0.0
    %91 = vmatprep.subr.mxu0 0.0
    %92 = vmatpush1.msra.mxu0 0.0
    %93 = vmatprep.subr.mxu0 0.0
    %94 = vmatpush1.msra.mxu0 0.0
    %95 = vmatprep.subr.mxu0 0.0
    %96 = vmatpush1.msra.mxu0 0.0
    %97 = vmatprep.subr.mxu0 0.0
    %98 = vmatpush1.msra.mxu0 0.0
    %99 = vmatprep.subr.mxu0 0.0
    %100 = vmatpush1.msra.mxu0 0.0
    %101 = vmatprep.subr.mxu0 0.0
    %102 = vmatpush1.msra.mxu0 0.0
    %103 = vmatprep.subr.mxu0 0.0
    %104 = vmatpush1.msra.mxu0 0.0
    %105 = vmatprep.subr.mxu0 0.0
    %106 = vmatpush1.msra.mxu0 0.0
    %107 = vmatprep.subr.mxu0 0.0
    %108 = vmatpush1.msra.mxu0 0.0
    %109 = vmatprep.subr.mxu0 0.0
    %110 = vmatpush1.msra.mxu0 0.0
    %111 = vmatprep.subr.mxu0 0.0
    %112 = vmatpush1.msra.mxu0 0.0
    %113 = vmatprep.subr.mxu0 0.0
    %114 = vmatpush1.msra.mxu0 0.0
    %115 = vmatprep.subr.mxu0 0.0
    %116 = vmatpush1.msra.mxu0 0.0
    %117 = vmatprep.subr.mxu0 0.0
    %118 = vmatpush1.msra.mxu0 0.0
    %119 = vmatprep.subr.mxu0 0.0
    %120 = vmatpush1.msra.mxu0 0.0
    %121 = vmatprep.subr.mxu0 0.0
    %122 = vmatpush1.msra.mxu0 0.0
    %123 = vmatprep.subr.mxu0 0.0
    %124 = vmatpush1.msra.mxu0 0.0
    %125 = vmatprep.subr.mxu0 0.0
    %126 = vmatpush1.msra.mxu0 0.0
    %127 = vmatprep.subr.mxu0 0.0
    %128 = vmatpush1.msra.mxu0 0.0
    %129 = vmatprep.subr.mxu0 0.0
    %130 = vmatpush1.msra.mxu0 0.0
    %131 = vmatprep.subr.mxu0 0.0
    %132 = vmatpush1.msra.mxu0 0.0
    %133 = vmatprep.subr.mxu0 0.0
    %134 = vmatpush1.msra.mxu0 0.0
    %135 = vmatprep.subr.mxu0 0.0
    %136 = vmatpush1.msra.mxu0 0.0
    %137 = vmatprep.subr.mxu0 0.0
    %138 = vmatpush1.msra.mxu0 0.0
    %139 = vmatprep.subr.mxu0 0.0
    %140 = vmatpush1.msra.mxu0 0.0
    %141 = vmatprep.subr.mxu0 0.0
    %142 = vmatpush1.msra.mxu0 0.0
    %143 = vmatprep.subr.mxu0 0.0
    %144 = vmatpush1.msra.mxu0 0.0
    %145 = vmatprep.subr.mxu0 0.0
    %146 = vmatpush1.msra.mxu0 0.0
    %147 = vmatprep.mubr.f32.mxu0 0.0
    %148 = vmatmul.mubr.f32.gmra.mrb[0].mxu0 %v60
    %v149 = vpop.f32.mrb[0].mxu0
    %v150 = vadd.f32 0.0, %v149
    %v151 = vpop.f32.mrb[0].mxu0
    %v152 = vadd.f32 0.0, %v151
    %153 = vmatprep.mubr.f32.mxu0 0.0
    %154 = vmatmul.mubr.f32.gmra.mrb[0].mxu0 %v63
    %v155 = vpop.f32.mrb[0].mxu0
    %v156 = vadd.f32 0.0, %v155
    %v157 = vpop.f32.mrb[0].mxu0
    %v158 = vadd.f32 0.0, %v157
    %159 = vmatprep.mubr.f32.mxu0 0.0
    %160 = vmatmul.mubr.f32.gmra.mrb[0].mxu0 %v66
    %v161 = vpop.f32.mrb[0].mxu0
    %v162 = vadd.f32 0.0, %v161
    %v163 = vpop.f32.mrb[0].mxu0
    %v164 = vadd.f32 0.0, %v163
    %165 = vmatprep.mubr.f32.mxu0 0.0
    %166 = vmatmul.mubr.f32.gmra.mrb[0].mxu0 %v69
    %v167 = vpop.f32.mrb[0].mxu0
    %v168 = vadd.f32 0.0, %v167
    %v169 = vpop.f32.mrb[0].mxu0
    %v170 = vadd.f32 0.0, %v169
    %171 = vmatprep.mubr.f32.mxu0 0.0
    %172 = vmatmul.mubr.f32.gmra.mrb[0].mxu0 %v72
    %v173 = vpop.f32.mrb[0].mxu0
    %v174 = vadd.f32 0.0, %v173
    %v175 = vpop.f32.mrb[0].mxu0
    %v176 = vadd.f32 0.0, %v175
    %177 = vmatprep.mubr.f32.mxu0 0.0
    %178 = vmatmul.mubr.f32.gmra.mrb[0].mxu0 %v75
    %v179 = vpop.f32.mrb[0].mxu0
    %v180 = vadd.f32 0.0, %v179
    %v181 = vpop.f32.mrb[0].mxu0
    %v182 = vadd.f32 0.0, %v181
    %183 = vmatprep.mubr.f32.mxu0 0.0
    %184 = vmatmul.mubr.f32.gmra.mrb[0].mxu0 %v78
    %v185 = vpop.f32.mrb[0].mxu0
    %v186 = vadd.f32 0.0, %v185
    %v187 = vpop.f32.mrb[0].mxu0
    %v188 = vadd.f32 0.0, %v187
    %189 = vmatprep.mubr.f32.mxu0 0.0
    %190 = vmatmul.mubr.f32.gmra.mrb[0].mxu0 %v81
    %v191 = vpop.f32.mrb[0].mxu0
    %v192 = vadd.f32 0.0, %v191
    %v193 = vpop.f32.mrb[0].mxu0
    %v194 = vadd.f32 0.0, %v193
    %195 = vdwg.mxu0
    %196 = vmatprep.subr.mxu0 %v37
    %197 = vmatpush1.msra.mxu0 %v36
    %198 = vmatprep.subr.mxu0 %v45
    %199 = vmatpush1.msra.mxu0 %v44
    %200 = vmatprep.subr.mxu0 0.0
    %201 = vmatpush1.msra.mxu0 0.0
    %202 = vmatprep.subr.mxu0 0.0
    %203 = vmatpush1.msra.mxu0 0.0
    %204 = vmatprep.subr.mxu0 0.0
    %205 = vmatpush1.msra.mxu0 0.0
    %206 = vmatprep.subr.mxu0 0.0
    %207 = vmatpush1.msra.mxu0 0.0
    %208 = vmatprep.subr.mxu0 0.0
    %209 = vmatpush1.msra.mxu0 0.0
    %210 = vmatprep.subr.mxu0 0.0
    %211 = vmatpush1.msra.mxu0 0.0
    %212 = vmatprep.subr.mxu0 0.0
    %213 = vmatpush1.msra.mxu0 0.0
    %214 = vmatprep.subr.mxu0 0.0
    %215 = vmatpush1.msra.mxu0 0.0
    %216 = vmatprep.subr.mxu0 0.0
    %217 = vmatpush1.msra.mxu0 0.0
    %218 = vmatprep.subr.mxu0 0.0
    %219 = vmatpush1.msra.mxu0 0.0
    %220 = vmatprep.subr.mxu0 0.0
    %221 = vmatpush1.msra.mxu0 0.0
    %222 = vmatprep.subr.mxu0 0.0
    %223 = vmatpush1.msra.mxu0 0.0
    %224 = vmatprep.subr.mxu0 0.0
    %225 = vmatpush1.msra.mxu0 0.0
    %226 = vmatprep.subr.mxu0 0.0
    %227 = vmatpush1.msra.mxu0 0.0
    %228 = vmatprep.subr.mxu0 0.0
    %229 = vmatpush1.msra.mxu0 0.0
    %230 = vmatprep.subr.mxu0 0.0
    %231 = vmatpush1.msra.mxu0 0.0
    %232 = vmatprep.subr.mxu0 0.0
    %233 = vmatpush1.msra.mxu0 0.0
    %234 = vmatprep.subr.mxu0 0.0
    %235 = vmatpush1.msra.mxu0 0.0
    %236 = vmatprep.subr.mxu0 0.0
    %237 = vmatpush1.msra.mxu0 0.0
    %238 = vmatprep.subr.mxu0 0.0
    %239 = vmatpush1.msra.mxu0 0.0
    %240 = vmatprep.subr.mxu0 0.0
    %241 = vmatpush1.msra.mxu0 0.0
    %242 = vmatprep.subr.mxu0 0.0
    %243 = vmatpush1.msra.mxu0 0.0
    %244 = vmatprep.subr.mxu0 0.0
    %245 = vmatpush1.msra.mxu0 0.0
    %246 = vmatprep.subr.mxu0 0.0
    %247 = vmatpush1.msra.mxu0 0.0
    %248 = vmatprep.subr.mxu0 0.0
    %249 = vmatpush1.msra.mxu0 0.0
    %250 = vmatprep.subr.mxu0 0.0
    %251 = vmatpush1.msra.mxu0 0.0
    %252 = vmatprep.subr.mxu0 0.0
    %253 = vmatpush1.msra.mxu0 0.0
    %254 = vmatprep.subr.mxu0 0.0
    %255 = vmatpush1.msra.mxu0 0.0
    %256 = vmatprep.subr.mxu0 0.0
    %257 = vmatpush1.msra.mxu0 0.0
    %258 = vmatprep.subr.mxu0 0.0
    %259 = vmatpush1.msra.mxu0 0.0
    %260 = vmatprep.mubr.f32.mxu0 0.0
    %261 = vmatmul.mubr.f32.gmra.mrb[0].mxu0 %v60
    %v262 = vpop.f32.mrb[0].mxu0
    %v263 = vadd.f32 0.0, %v262
    %v264 = vpop.f32.mrb[0].mxu0
    %v265 = vadd.f32 0.0, %v264
    %266 = vmatprep.mubr.f32.mxu0 0.0
    %267 = vmatmul.mubr.f32.gmra.mrb[0].mxu0 %v63
    %v268 = vpop.f32.mrb[0].mxu0
    %v269 = vadd.f32 0.0, %v268
    %v270 = vpop.f32.mrb[0].mxu0
    %v271 = vadd.f32 0.0, %v270
    %272 = vmatprep.mubr.f32.mxu0 0.0
    %273 = vmatmul.mubr.f32.gmra.mrb[0].mxu0 %v66
    %v274 = vpop.f32.mrb[0].mxu0
    %v275 = vadd.f32 0.0, %v274
    %v276 = vpop.f32.mrb[0].mxu0
    %v277 = vadd.f32 0.0, %v276
    %278 = vmatprep.mubr.f32.mxu0 0.0
    %279 = vmatmul.mubr.f32.gmra.mrb[0].mxu0 %v69
    %v280 = vpop.f32.mrb[0].mxu0
    %v281 = vadd.f32 0.0, %v280
    %v282 = vpop.f32.mrb[0].mxu0
    %v283 = vadd.f32 0.0, %v282
    %284 = vmatprep.mubr.f32.mxu0 0.0
    %285 = vmatmul.mubr.f32.gmra.mrb[0].mxu0 %v72
    %v286 = vpop.f32.mrb[0].mxu0
    %v287 = vadd.f32 0.0, %v286
    %v288 = vpop.f32.mrb[0].mxu0
    %v289 = vadd.f32 0.0, %v288
    %290 = vmatprep.mubr.f32.mxu0 0.0
    %291 = vmatmul.mubr.f32.gmra.mrb[0].mxu0 %v75
    %v292 = vpop.f32.mrb[0].mxu0
    %v293 = vadd.f32 0.0, %v292
    %v294 = vpop.f32.mrb[0].mxu0
    %v295 = vadd.f32 0.0, %v294
    %296 = vmatprep.mubr.f32.mxu0 0.0
    %297 = vmatmul.mubr.f32.gmra.mrb[0].mxu0 %v78
    %v298 = vpop.f32.mrb[0].mxu0
    %v299 = vadd.f32 0.0, %v298
    %v300 = vpop.f32.mrb[0].mxu0
    %v301 = vadd.f32 0.0, %v300
    %302 = vmatprep.mubr.f32.mxu0 0.0
    %303 = vmatmul.mubr.f32.gmra.mrb[0].mxu0 %v81
    %v304 = vpop.f32.mrb[0].mxu0
    %v305 = vadd.f32 0.0, %v304
    %v306 = vpop.f32.mrb[0].mxu0
    %v307 = vadd.f32 0.0, %v306
    %308 = vdwg.mxu0
    %309 = vmatprep.subr.mxu0 %v39
    %310 = vmatpush1.msra.mxu0 %v38
    %311 = vmatprep.subr.mxu0 %v47
    %312 = vmatpush1.msra.mxu0 %v46
    %313 = vmatprep.subr.mxu0 0.0
    %314 = vmatpush1.msra.mxu0 0.0
    %315 = vmatprep.subr.mxu0 0.0
    %316 = vmatpush1.msra.mxu0 0.0
    %317 = vmatprep.subr.mxu0 0.0
    %318 = vmatpush1.msra.mxu0 0.0
    %319 = vmatprep.subr.mxu0 0.0
    %320 = vmatpush1.msra.mxu0 0.0
    %321 = vmatprep.subr.mxu0 0.0
    %322 = vmatpush1.msra.mxu0 0.0
    %323 = vmatprep.subr.mxu0 0.0
    %324 = vmatpush1.msra.mxu0 0.0
    %325 = vmatprep.subr.mxu0 0.0
    %326 = vmatpush1.msra.mxu0 0.0
    %327 = vmatprep.subr.mxu0 0.0
    %328 = vmatpush1.msra.mxu0 0.0
    %329 = vmatprep.subr.mxu0 0.0
    %330 = vmatpush1.msra.mxu0 0.0
    %331 = vmatprep.subr.mxu0 0.0
    %332 = vmatpush1.msra.mxu0 0.0
    %333 = vmatprep.subr.mxu0 0.0
    %334 = vmatpush1.msra.mxu0 0.0
    %335 = vmatprep.subr.mxu0 0.0
    %336 = vmatpush1.msra.mxu0 0.0
    %337 = vmatprep.subr.mxu0 0.0
    %338 = vmatpush1.msra.mxu0 0.0
    %339 = vmatprep.subr.mxu0 0.0
    %340 = vmatpush1.msra.mxu0 0.0
    %341 = vmatprep.subr.mxu0 0.0
    %342 = vmatpush1.msra.mxu0 0.0
    %343 = vmatprep.subr.mxu0 0.0
    %344 = vmatpush1.msra.mxu0 0.0
    %345 = vmatprep.subr.mxu0 0.0
    %346 = vmatpush1.msra.mxu0 0.0
    %347 = vmatprep.subr.mxu0 0.0
    %348 = vmatpush1.msra.mxu0 0.0
    %349 = vmatprep.subr.mxu0 0.0
    %350 = vmatpush1.msra.mxu0 0.0
    %351 = vmatprep.subr.mxu0 0.0
    %352 = vmatpush1.msra.mxu0 0.0
    %353 = vmatprep.subr.mxu0 0.0
    %354 = vmatpush1.msra.mxu0 0.0
    %355 = vmatprep.subr.mxu0 0.0
    %356 = vmatpush1.msra.mxu0 0.0
    %357 = vmatprep.subr.mxu0 0.0
    %358 = vmatpush1.msra.mxu0 0.0
    %359 = vmatprep.subr.mxu0 0.0
    %360 = vmatpush1.msra.mxu0 0.0
    %361 = vmatprep.subr.mxu0 0.0
    %362 = vmatpush1.msra.mxu0 0.0
    %363 = vmatprep.subr.mxu0 0.0
    %364 = vmatpush1.msra.mxu0 0.0
    %365 = vmatprep.subr.mxu0 0.0
    %366 = vmatpush1.msra.mxu0 0.0
    %367 = vmatprep.subr.mxu0 0.0
    %368 = vmatpush1.msra.mxu0 0.0
    %369 = vmatprep.subr.mxu0 0.0
    %370 = vmatpush1.msra.mxu0 0.0
    %371 = vmatprep.subr.mxu0 0.0
    %372 = vmatpush1.msra.mxu0 0.0
    %373 = vmatprep.mubr.f32.mxu0 0.0
    %374 = vmatmul.mubr.f32.gmra.mrb[0].mxu0 %v60
    %v375 = vpop.f32.mrb[0].mxu0
    %v376 = vadd.f32 0.0, %v375
    %v377 = vpop.f32.mrb[0].mxu0
    %v378 = vadd.f32 0.0, %v377
    %379 = vmatprep.mubr.f32.mxu0 0.0
    %380 = vmatmul.mubr.f32.gmra.mrb[0].mxu0 %v63
    %v381 = vpop.f32.mrb[0].mxu0
    %v382 = vadd.f32 0.0, %v381
    %v383 = vpop.f32.mrb[0].mxu0
    %v384 = vadd.f32 0.0, %v383
    %385 = vmatprep.mubr.f32.mxu0 0.0
    %386 = vmatmul.mubr.f32.gmra.mrb[0].mxu0 %v66
    %v387 = vpop.f32.mrb[0].mxu0
    %v388 = vadd.f32 0.0, %v387
    %v389 = vpop.f32.mrb[0].mxu0
    %v390 = vadd.f32 0.0, %v389
    %391 = vmatprep.mubr.f32.mxu0 0.0
    %392 = vmatmul.mubr.f32.gmra.mrb[0].mxu0 %v69
    %v393 = vpop.f32.mrb[0].mxu0
    %v394 = vadd.f32 0.0, %v393
    %v395 = vpop.f32.mrb[0].mxu0
    %v396 = vadd.f32 0.0, %v395
    %397 = vmatprep.mubr.f32.mxu0 0.0
    %398 = vmatmul.mubr.f32.gmra.mrb[0].mxu0 %v72
    %v399 = vpop.f32.mrb[0].mxu0
    %v400 = vadd.f32 0.0, %v399
    %v401 = vpop.f32.mrb[0].mxu0
    %v402 = vadd.f32 0.0, %v401
    %403 = vmatprep.mubr.f32.mxu0 0.0
    %404 = vmatmul.mubr.f32.gmra.mrb[0].mxu0 %v75
    %v405 = vpop.f32.mrb[0].mxu0
    %v406 = vadd.f32 0.0, %v405
    %v407 = vpop.f32.mrb[0].mxu0
    %v408 = vadd.f32 0.0, %v407
    %409 = vmatprep.mubr.f32.mxu0 0.0
    %410 = vmatmul.mubr.f32.gmra.mrb[0].mxu0 %v78
    %v411 = vpop.f32.mrb[0].mxu0
    %v412 = vadd.f32 0.0, %v411
    %v413 = vpop.f32.mrb[0].mxu0
    %v414 = vadd.f32 0.0, %v413
    %415 = vmatprep.mubr.f32.mxu0 0.0
    %416 = vmatmul.mubr.f32.gmra.mrb[0].mxu0 %v81
    %v417 = vpop.f32.mrb[0].mxu0
    %v418 = vadd.f32 0.0, %v417
    %v419 = vpop.f32.mrb[0].mxu0
    %v420 = vadd.f32 0.0, %v419
    %421 = vdwg.mxu0
    %422 = vmatprep.subr.mxu0 %v41
    %423 = vmatpush1.msra.mxu0 %v40
    %424 = vmatprep.subr.mxu0 %v49
    %425 = vmatpush1.msra.mxu0 %v48
    %426 = vmatprep.subr.mxu0 0.0
    %427 = vmatpush1.msra.mxu0 0.0
    %428 = vmatprep.subr.mxu0 0.0
    %429 = vmatpush1.msra.mxu0 0.0
    %430 = vmatprep.subr.mxu0 0.0
    %431 = vmatpush1.msra.mxu0 0.0
    %432 = vmatprep.subr.mxu0 0.0
    %433 = vmatpush1.msra.mxu0 0.0
    %434 = vmatprep.subr.mxu0 0.0
    %435 = vmatpush1.msra.mxu0 0.0
    %436 = vmatprep.subr.mxu0 0.0
    %437 = vmatpush1.msra.mxu0 0.0
    %438 = vmatprep.subr.mxu0 0.0
    %439 = vmatpush1.msra.mxu0 0.0
    %440 = vmatprep.subr.mxu0 0.0
    %441 = vmatpush1.msra.mxu0 0.0
    %442 = vmatprep.subr.mxu0 0.0
    %443 = vmatpush1.msra.mxu0 0.0
    %444 = vmatprep.subr.mxu0 0.0
    %445 = vmatpush1.msra.mxu0 0.0
    %446 = vmatprep.subr.mxu0 0.0
    %447 = vmatpush1.msra.mxu0 0.0
    %448 = vmatprep.subr.mxu0 0.0
    %449 = vmatpush1.msra.mxu0 0.0
    %450 = vmatprep.subr.mxu0 0.0
    %451 = vmatpush1.msra.mxu0 0.0
    %452 = vmatprep.subr.mxu0 0.0
    %453 = vmatpush1.msra.mxu0 0.0
    %454 = vmatprep.subr.mxu0 0.0
    %455 = vmatpush1.msra.mxu0 0.0
    %456 = vmatprep.subr.mxu0 0.0
    %457 = vmatpush1.msra.mxu0 0.0
    %458 = vmatprep.subr.mxu0 0.0
    %459 = vmatpush1.msra.mxu0 0.0
    %460 = vmatprep.subr.mxu0 0.0
    %461 = vmatpush1.msra.mxu0 0.0
    %462 = vmatprep.subr.mxu0 0.0
    %463 = vmatpush1.msra.mxu0 0.0
    %464 = vmatprep.subr.mxu0 0.0
    %465 = vmatpush1.msra.mxu0 0.0
    %466 = vmatprep.subr.mxu0 0.0
    %467 = vmatpush1.msra.mxu0 0.0
    %468 = vmatprep.subr.mxu0 0.0
    %469 = vmatpush1.msra.mxu0 0.0
    %470 = vmatprep.subr.mxu0 0.0
    %471 = vmatpush1.msra.mxu0 0.0
    %472 = vmatprep.subr.mxu0 0.0
    %473 = vmatpush1.msra.mxu0 0.0
    %474 = vmatprep.subr.mxu0 0.0
    %475 = vmatpush1.msra.mxu0 0.0
    %476 = vmatprep.subr.mxu0 0.0
    %477 = vmatpush1.msra.mxu0 0.0
    %478 = vmatprep.subr.mxu0 0.0
    %479 = vmatpush1.msra.mxu0 0.0
    %480 = vmatprep.subr.mxu0 0.0
    %481 = vmatpush1.msra.mxu0 0.0
    %482 = vmatprep.subr.mxu0 0.0
    %483 = vmatpush1.msra.mxu0 0.0
    %484 = vmatprep.subr.mxu0 0.0
    %485 = vmatpush1.msra.mxu0 0.0
    %486 = vmatprep.mubr.f32.mxu0 0.0
    %487 = vmatmul.mubr.f32.gmra.mrb[0].mxu0 %v60
    %v488 = vpop.f32.mrb[0].mxu0
    %v489 = vadd.f32 0.0, %v488
    %v490 = vpop.f32.mrb[0].mxu0
    %v491 = vadd.f32 0.0, %v490
    %492 = vmatprep.mubr.f32.mxu0 0.0
    %493 = vmatmul.mubr.f32.gmra.mrb[0].mxu0 %v63
    %v494 = vpop.f32.mrb[0].mxu0
    %v495 = vadd.f32 0.0, %v494
    %v496 = vpop.f32.mrb[0].mxu0
    %v497 = vadd.f32 0.0, %v496
    %498 = vmatprep.mubr.f32.mxu0 0.0
    %499 = vmatmul.mubr.f32.gmra.mrb[0].mxu0 %v66
    %v500 = vpop.f32.mrb[0].mxu0
    %v501 = vadd.f32 0.0, %v500
    %v502 = vpop.f32.mrb[0].mxu0
    %v503 = vadd.f32 0.0, %v502
    %504 = vmatprep.mubr.f32.mxu0 0.0
    %505 = vmatmul.mubr.f32.gmra.mrb[0].mxu0 %v69
    %v506 = vpop.f32.mrb[0].mxu0
    %v507 = vadd.f32 0.0, %v506
    %v508 = vpop.f32.mrb[0].mxu0
    %v509 = vadd.f32 0.0, %v508
    %510 = vmatprep.mubr.f32.mxu0 0.0
    %511 = vmatmul.mubr.f32.gmra.mrb[0].mxu0 %v72
    %v512 = vpop.f32.mrb[0].mxu0
    %v513 = vadd.f32 0.0, %v512
    %v514 = vpop.f32.mrb[0].mxu0
    %v515 = vadd.f32 0.0, %v514
    %516 = vmatprep.mubr.f32.mxu0 0.0
    %517 = vmatmul.mubr.f32.gmra.mrb[0].mxu0 %v75
    %v518 = vpop.f32.mrb[0].mxu0
    %v519 = vadd.f32 0.0, %v518
    %v520 = vpop.f32.mrb[0].mxu0
    %v521 = vadd.f32 0.0, %v520
    %522 = vmatprep.mubr.f32.mxu0 0.0
    %523 = vmatmul.mubr.f32.gmra.mrb[0].mxu0 %v78
    %v524 = vpop.f32.mrb[0].mxu0
    %v525 = vadd.f32 0.0, %v524
    %v526 = vpop.f32.mrb[0].mxu0
    %v527 = vadd.f32 0.0, %v526
    %528 = vmatprep.mubr.f32.mxu0 0.0
    %529 = vmatmul.mubr.f32.gmra.mrb[0].mxu0 %v81
    %v530 = vpop.f32.mrb[0].mxu0
    %v531 = vadd.f32 0.0, %v530
    %v532 = vpop.f32.mrb[0].mxu0
    %v533 = vadd.f32 0.0, %v532
    %534 = vdwg.mxu0
    %v535 = vld [vmem:[%s2] sm:$0xff]
    %v536 = vld [vmem:[%s2 + $0x8] sm:$0xff]
    %v537 = vld [vmem:[%s2 + $0x10] sm:$0xff]
    %v538 = vld [vmem:[%s2 + $0x18] sm:$0xff]
    %v539 = vld [vmem:[%s2 + $0x20] sm:$0xff]
    %v540 = vld [vmem:[%s2 + $0x28] sm:$0xff]
    %v541 = vld [vmem:[%s2 + $0x30] sm:$0xff]
    %v542 = vld [vmem:[%s2 + $0x38] sm:$0xff]
    %544 = vset.pattern.permute.xlu0 0
    %545 = vperm.xlu0 %544, %v535
    %v546 = vpop.permute.xlu0 %545
    %549 = vset.pattern.permute.xlu0 0
    %550 = vperm.xlu0 %549, %v536
    %v551 = vpop.permute.xlu0 %550
    %554 = vset.pattern.permute.xlu0 0
    %555 = vperm.xlu0 %554, %v537
    %v556 = vpop.permute.xlu0 %555
    %559 = vset.pattern.permute.xlu0 0
    %560 = vperm.xlu0 %559, %v538
    %v561 = vpop.permute.xlu0 %560
    %564 = vset.pattern.permute.xlu0 0
    %565 = vperm.xlu0 %564, %v539
    %v566 = vpop.permute.xlu0 %565
    %569 = vset.pattern.permute.xlu0 0
    %570 = vperm.xlu0 %569, %v540
    %v571 = vpop.permute.xlu0 %570
    %574 = vset.pattern.permute.xlu0 0
    %575 = vperm.xlu0 %574, %v541
    %v576 = vpop.permute.xlu0 %575
    %579 = vset.pattern.permute.xlu0 0
    %580 = vperm.xlu0 %579, %v542
    %v581 = vpop.permute.xlu0 %580
    %vm583 = vcmp.eq.f32.partialorder %v150, %v546
    %vm584 = vcmp.eq.f32.partialorder %v152, %v546
    %vm585 = vcmp.eq.f32.partialorder %v263, %v546
    %vm586 = vcmp.eq.f32.partialorder %v265, %v546
    %vm587 = vcmp.eq.f32.partialorder %v376, %v546
    %vm588 = vcmp.eq.f32.partialorder %v378, %v546
    %vm589 = vcmp.eq.f32.partialorder %v489, %v546
    %vm590 = vcmp.eq.f32.partialorder %v491, %v546
    %vm591 = vcmp.eq.f32.partialorder %v156, %v551
    %vm592 = vcmp.eq.f32.partialorder %v158, %v551
    %vm593 = vcmp.eq.f32.partialorder %v269, %v551
    %vm594 = vcmp.eq.f32.partialorder %v271, %v551
    %vm595 = vcmp.eq.f32.partialorder %v382, %v551
    %vm596 = vcmp.eq.f32.partialorder %v384, %v551
    %vm597 = vcmp.eq.f32.partialorder %v495, %v551
    %vm598 = vcmp.eq.f32.partialorder %v497, %v551
    %vm599 = vcmp.eq.f32.partialorder %v162, %v556
    %vm600 = vcmp.eq.f32.partialorder %v164, %v556
    %vm601 = vcmp.eq.f32.partialorder %v275, %v556
    %vm602 = vcmp.eq.f32.partialorder %v277, %v556
    %vm603 = vcmp.eq.f32.partialorder %v388, %v556
    %vm604 = vcmp.eq.f32.partialorder %v390, %v556
    %vm605 = vcmp.eq.f32.partialorder %v501, %v556
    %vm606 = vcmp.eq.f32.partialorder %v503, %v556
    %vm607 = vcmp.eq.f32.partialorder %v168, %v561
    %vm608 = vcmp.eq.f32.partialorder %v170, %v561
    %vm609 = vcmp.eq.f32.partialorder %v281, %v561
    %vm610 = vcmp.eq.f32.partialorder %v283, %v561
    %vm611 = vcmp.eq.f32.partialorder %v394, %v561
    %vm612 = vcmp.eq.f32.partialorder %v396, %v561
    %vm613 = vcmp.eq.f32.partialorder %v507, %v561
    %vm614 = vcmp.eq.f32.partialorder %v509, %v561
    %vm615 = vcmp.eq.f32.partialorder %v174, %v566
    %vm616 = vcmp.eq.f32.partialorder %v176, %v566
    %vm617 = vcmp.eq.f32.partialorder %v287, %v566
    %vm618 = vcmp.eq.f32.partialorder %v289, %v566
    %vm619 = vcmp.eq.f32.partialorder %v400, %v566
    %vm620 = vcmp.eq.f32.partialorder %v402, %v566
    %vm621 = vcmp.eq.f32.partialorder %v513, %v566
    %vm622 = vcmp.eq.f32.partialorder %v515, %v566
    %vm623 = vcmp.eq.f32.partialorder %v180, %v571
    %vm624 = vcmp.eq.f32.partialorder %v182, %v571
    %vm625 = vcmp.eq.f32.partialorder %v293, %v571
    %vm626 = vcmp.eq.f32.partialorder %v295, %v571
    %vm627 = vcmp.eq.f32.partialorder %v406, %v571
    %vm628 = vcmp.eq.f32.partialorder %v408, %v571
    %vm629 = vcmp.eq.f32.partialorder %v519, %v571
    %vm630 = vcmp.eq.f32.partialorder %v521, %v571
    %vm631 = vcmp.eq.f32.partialorder %v186, %v576
    %vm632 = vcmp.eq.f32.partialorder %v188, %v576
    %vm633 = vcmp.eq.f32.partialorder %v299, %v576
    %vm634 = vcmp.eq.f32.partialorder %v301, %v576
    %vm635 = vcmp.eq.f32.partialorder %v412, %v576
    %vm636 = vcmp.eq.f32.partialorder %v414, %v576
    %vm637 = vcmp.eq.f32.partialorder %v525, %v576
    %vm638 = vcmp.eq.f32.partialorder %v527, %v576
    %vm639 = vcmp.eq.f32.partialorder %v192, %v581
    %vm640 = vcmp.eq.f32.partialorder %v194, %v581
    %vm641 = vcmp.eq.f32.partialorder %v305, %v581
    %vm642 = vcmp.eq.f32.partialorder %v307, %v581
    %vm643 = vcmp.eq.f32.partialorder %v418, %v581
    %vm644 = vcmp.eq.f32.partialorder %v420, %v581
    %vm645 = vcmp.eq.f32.partialorder %v531, %v581
    %vm646 = vcmp.eq.f32.partialorder %v533, %v581
    %v647 = vld [vmem:[%s3] sm:$0xff]
    %v648 = vld [vmem:[%s3 + $0x8] sm:$0xff]
    %v649 = vld [vmem:[%s3 + $0x10] sm:$0xff]
    %v650 = vld [vmem:[%s3 + $0x18] sm:$0xff]
    %v651 = vld [vmem:[%s3 + $0x20] sm:$0xff]
    %v652 = vld [vmem:[%s3 + $0x28] sm:$0xff]
    %v653 = vld [vmem:[%s3 + $0x30] sm:$0xff]
    %v654 = vld [vmem:[%s3 + $0x38] sm:$0xff]
    %656 = vset.pattern.permute.xlu0 0
    %657 = vperm.xlu0 %656, %v647
    %v658 = vpop.permute.xlu0 %657
    %661 = vset.pattern.permute.xlu0 0
    %662 = vperm.xlu0 %661, %v648
    %v663 = vpop.permute.xlu0 %662
    %666 = vset.pattern.permute.xlu0 0
    %667 = vperm.xlu0 %666, %v649
    %v668 = vpop.permute.xlu0 %667
    %671 = vset.pattern.permute.xlu0 0
    %672 = vperm.xlu0 %671, %v650
    %v673 = vpop.permute.xlu0 %672
    %676 = vset.pattern.permute.xlu0 0
    %677 = vperm.xlu0 %676, %v651
    %v678 = vpop.permute.xlu0 %677
    %681 = vset.pattern.permute.xlu0 0
    %682 = vperm.xlu0 %681, %v652
    %v683 = vpop.permute.xlu0 %682
    %686 = vset.pattern.permute.xlu0 0
    %687 = vperm.xlu0 %686, %v653
    %v688 = vpop.permute.xlu0 %687
    %691 = vset.pattern.permute.xlu0 0
    %692 = vperm.xlu0 %691, %v654
    %v693 = vpop.permute.xlu0 %692
    %v695 = vmul.f32 %v150, %v658
    %v696 = vmul.f32 %v152, %v658
    %v697 = vmul.f32 %v263, %v658
    %v698 = vmul.f32 %v265, %v658
    %v699 = vmul.f32 %v376, %v658
    %v700 = vmul.f32 %v378, %v658
    %v701 = vmul.f32 %v489, %v658
    %v702 = vmul.f32 %v491, %v658
    %v703 = vmul.f32 %v156, %v663
    %v704 = vmul.f32 %v158, %v663
    %v705 = vmul.f32 %v269, %v663
    %v706 = vmul.f32 %v271, %v663
    %v707 = vmul.f32 %v382, %v663
    %v708 = vmul.f32 %v384, %v663
    %v709 = vmul.f32 %v495, %v663
    %v710 = vmul.f32 %v497, %v663
    %v711 = vmul.f32 %v162, %v668
    %v712 = vmul.f32 %v164, %v668
    %v713 = vmul.f32 %v275, %v668
    %v714 = vmul.f32 %v277, %v668
    %v715 = vmul.f32 %v388, %v668
    %v716 = vmul.f32 %v390, %v668
    %v717 = vmul.f32 %v501, %v668
    %v718 = vmul.f32 %v503, %v668
    %v719 = vmul.f32 %v168, %v673
    %v720 = vmul.f32 %v170, %v673
    %v721 = vmul.f32 %v281, %v673
    %v722 = vmul.f32 %v283, %v673
    %v723 = vmul.f32 %v394, %v673
    %v724 = vmul.f32 %v396, %v673
    %v725 = vmul.f32 %v507, %v673
    %v726 = vmul.f32 %v509, %v673
    %v727 = vmul.f32 %v174, %v678
    %v728 = vmul.f32 %v176, %v678
    %v729 = vmul.f32 %v287, %v678
    %v730 = vmul.f32 %v289, %v678
    %v731 = vmul.f32 %v400, %v678
    %v732 = vmul.f32 %v402, %v678
    %v733 = vmul.f32 %v513, %v678
    %v734 = vmul.f32 %v515, %v678
    %v735 = vmul.f32 %v180, %v683
    %v736 = vmul.f32 %v182, %v683
    %v737 = vmul.f32 %v293, %v683
    %v738 = vmul.f32 %v295, %v683
    %v739 = vmul.f32 %v406, %v683
    %v740 = vmul.f32 %v408, %v683
    %v741 = vmul.f32 %v519, %v683
    %v742 = vmul.f32 %v521, %v683
    %v743 = vmul.f32 %v186, %v688
    %v744 = vmul.f32 %v188, %v688
    %v745 = vmul.f32 %v299, %v688
    %v746 = vmul.f32 %v301, %v688
    %v747 = vmul.f32 %v412, %v688
    %v748 = vmul.f32 %v414, %v688
    %v749 = vmul.f32 %v525, %v688
    %v750 = vmul.f32 %v527, %v688
    %v751 = vmul.f32 %v192, %v693
    %v752 = vmul.f32 %v194, %v693
    %v753 = vmul.f32 %v305, %v693
    %v754 = vmul.f32 %v307, %v693
    %v755 = vmul.f32 %v418, %v693
    %v756 = vmul.f32 %v420, %v693
    %v757 = vmul.f32 %v531, %v693
    %v758 = vmul.f32 %v533, %v693
    %v759 = vsel %vm583, 1.0, %v695
    %v760 = vsel %vm584, 1.0, %v696
    %v761 = vsel %vm585, 1.0, %v697
    %v762 = vsel %vm586, 1.0, %v698
    %v763 = vsel %vm587, 1.0, %v699
    %v764 = vsel %vm588, 1.0, %v700
    %v765 = vsel %vm589, 1.0, %v701
    %v766 = vsel %vm590, 1.0, %v702
    %v767 = vsel %vm591, 1.0, %v703
    %v768 = vsel %vm592, 1.0, %v704
    %v769 = vsel %vm593, 1.0, %v705
    %v770 = vsel %vm594, 1.0, %v706
    %v771 = vsel %vm595, 1.0, %v707
    %v772 = vsel %vm596, 1.0, %v708
    %v773 = vsel %vm597, 1.0, %v709
    %v774 = vsel %vm598, 1.0, %v710
    %v775 = vsel %vm599, 1.0, %v711
    %v776 = vsel %vm600, 1.0, %v712
    %v777 = vsel %vm601, 1.0, %v713
    %v778 = vsel %vm602, 1.0, %v714
    %v779 = vsel %vm603, 1.0, %v715
    %v780 = vsel %vm604, 1.0, %v716
    %v781 = vsel %vm605, 1.0, %v717
    %v782 = vsel %vm606, 1.0, %v718
    %v783 = vsel %vm607, 1.0, %v719
    %v784 = vsel %vm608, 1.0, %v720
    %v785 = vsel %vm609, 1.0, %v721
    %v786 = vsel %vm610, 1.0, %v722
    %v787 = vsel %vm611, 1.0, %v723
    %v788 = vsel %vm612, 1.0, %v724
    %v789 = vsel %vm613, 1.0, %v725
    %v790 = vsel %vm614, 1.0, %v726
    %v791 = vsel %vm615, 1.0, %v727
    %v792 = vsel %vm616, 1.0, %v728
    %v793 = vsel %vm617, 1.0, %v729
    %v794 = vsel %vm618, 1.0, %v730
    %v795 = vsel %vm619, 1.0, %v731
    %v796 = vsel %vm620, 1.0, %v732
    %v797 = vsel %vm621, 1.0, %v733
    %v798 = vsel %vm622, 1.0, %v734
    %v799 = vsel %vm623, 1.0, %v735
    %v800 = vsel %vm624, 1.0, %v736
    %v801 = vsel %vm625, 1.0, %v737
    %v802 = vsel %vm626, 1.0, %v738
    %v803 = vsel %vm627, 1.0, %v739
    %v804 = vsel %vm628, 1.0, %v740
    %v805 = vsel %vm629, 1.0, %v741
    %v806 = vsel %vm630, 1.0, %v742
    %v807 = vsel %vm631, 1.0, %v743
    %v808 = vsel %vm632, 1.0, %v744
    %v809 = vsel %vm633, 1.0, %v745
    %v810 = vsel %vm634, 1.0, %v746
    %v811 = vsel %vm635, 1.0, %v747
    %v812 = vsel %vm636, 1.0, %v748
    %v813 = vsel %vm637, 1.0, %v749
    %v814 = vsel %vm638, 1.0, %v750
    %v815 = vsel %vm639, 1.0, %v751
    %v816 = vsel %vm640, 1.0, %v752
    %v817 = vsel %vm641, 1.0, %v753
    %v818 = vsel %vm642, 1.0, %v754
    %v819 = vsel %vm643, 1.0, %v755
    %v820 = vsel %vm644, 1.0, %v756
    %v821 = vsel %vm645, 1.0, %v757
    %v822 = vsel %vm646, 1.0, %v758
    %v823 = vld [vmem:[%s4] sm:$0xff]
    %v824 = vld [vmem:[%s4 + $0x8] sm:$0xff]
    %vm825 = vcmask 523264
    %v827 = vsel %vm825, %v823, 0
    %v830 = vsel %vm825, %v824, 0
    %832 = vmatprep.subr.mxu0 %v760
    %833 = vmatpush1.msra.mxu0 %v759
    %834 = vmatprep.subr.mxu0 %v768
    %835 = vmatpush1.msra.mxu0 %v767
    %836 = vmatprep.subr.mxu0 %v776
    %837 = vmatpush1.msra.mxu0 %v775
    %838 = vmatprep.subr.mxu0 %v784
    %839 = vmatpush1.msra.mxu0 %v783
    %840 = vmatprep.subr.mxu0 %v792
    %841 = vmatpush1.msra.mxu0 %v791
    %842 = vmatprep.subr.mxu0 %v800
    %843 = vmatpush1.msra.mxu0 %v799
    %844 = vmatprep.subr.mxu0 %v808
    %845 = vmatpush1.msra.mxu0 %v807
    %846 = vmatprep.subr.mxu0 %v816
    %847 = vmatpush1.msra.mxu0 %v815
    %848 = vmatprep.subr.mxu0 0.0
    %849 = vmatpush1.msra.mxu0 0.0
    %850 = vmatprep.subr.mxu0 0.0
    %851 = vmatpush1.msra.mxu0 0.0
    %852 = vmatprep.subr.mxu0 0.0
    %853 = vmatpush1.msra.mxu0 0.0
    %854 = vmatprep.subr.mxu0 0.0
    %855 = vmatpush1.msra.mxu0 0.0
    %856 = vmatprep.subr.mxu0 0.0
    %857 = vmatpush1.msra.mxu0 0.0
    %858 = vmatprep.subr.mxu0 0.0
    %859 = vmatpush1.msra.mxu0 0.0
    %860 = vmatprep.subr.mxu0 0.0
    %861 = vmatpush1.msra.mxu0 0.0
    %862 = vmatprep.subr.mxu0 0.0
    %863 = vmatpush1.msra.mxu0 0.0
    %864 = vmatprep.subr.mxu0 0.0
    %865 = vmatpush1.msra.mxu0 0.0
    %866 = vmatprep.subr.mxu0 0.0
    %867 = vmatpush1.msra.mxu0 0.0
    %868 = vmatprep.subr.mxu0 0.0
    %869 = vmatpush1.msra.mxu0 0.0
    %870 = vmatprep.subr.mxu0 0.0
    %871 = vmatpush1.msra.mxu0 0.0
    %872 = vmatprep.subr.mxu0 0.0
    %873 = vmatpush1.msra.mxu0 0.0
    %874 = vmatprep.subr.mxu0 0.0
    %875 = vmatpush1.msra.mxu0 0.0
    %876 = vmatprep.subr.mxu0 0.0
    %877 = vmatpush1.msra.mxu0 0.0
    %878 = vmatprep.subr.mxu0 0.0
    %879 = vmatpush1.msra.mxu0 0.0
    %880 = vmatprep.subr.mxu0 0.0
    %881 = vmatpush1.msra.mxu0 0.0
    %882 = vmatprep.subr.mxu0 0.0
    %883 = vmatpush1.msra.mxu0 0.0
    %884 = vmatprep.subr.mxu0 0.0
    %885 = vmatpush1.msra.mxu0 0.0
    %886 = vmatprep.subr.mxu0 0.0
    %887 = vmatpush1.msra.mxu0 0.0
    %888 = vmatprep.subr.mxu0 0.0
    %889 = vmatpush1.msra.mxu0 0.0
    %890 = vmatprep.subr.mxu0 0.0
    %891 = vmatpush1.msra.mxu0 0.0
    %892 = vmatprep.subr.mxu0 0.0
    %893 = vmatpush1.msra.mxu0 0.0
    %894 = vmatprep.subr.mxu0 0.0
    %895 = vmatpush1.msra.mxu0 0.0
    %896 = vmatprep.mubr.f32.mxu0 0.0
    %897 = vmatmul.mubr.f32.gmra.mrb[0].mxu0 %v827
    %v898 = vpop.f32.mrb[0].mxu0
    %v899 = vadd.f32 0.0, %v898
    %v900 = vpop.f32.mrb[0].mxu0
    %v901 = vadd.f32 0.0, %v900
    %902 = vmatprep.mubr.f32.mxu0 0.0
    %903 = vmatmul.mubr.f32.gmra.mrb[0].mxu0 %v830
    %v904 = vpop.f32.mrb[0].mxu0
    %v905 = vadd.f32 0.0, %v904
    %v906 = vpop.f32.mrb[0].mxu0
    %v907 = vadd.f32 0.0, %v906
    %908 = vdwg.mxu0
    %909 = vmatprep.subr.mxu0 %v762
    %910 = vmatpush1.msra.mxu0 %v761
    %911 = vmatprep.subr.mxu0 %v770
    %912 = vmatpush1.msra.mxu0 %v769
    %913 = vmatprep.subr.mxu0 %v778
    %914 = vmatpush1.msra.mxu0 %v777
    %915 = vmatprep.subr.mxu0 %v786
    %916 = vmatpush1.msra.mxu0 %v785
    %917 = vmatprep.subr.mxu0 %v794
    %918 = vmatpush1.msra.mxu0 %v793
    %919 = vmatprep.subr.mxu0 %v802
    %920 = vmatpush1.msra.mxu0 %v801
    %921 = vmatprep.subr.mxu0 %v810
    %922 = vmatpush1.msra.mxu0 %v809
    %923 = vmatprep.subr.mxu0 %v818
    %924 = vmatpush1.msra.mxu0 %v817
    %925 = vmatprep.subr.mxu0 0.0
    %926 = vmatpush1.msra.mxu0 0.0
    %927 = vmatprep.subr.mxu0 0.0
    %928 = vmatpush1.msra.mxu0 0.0
    %929 = vmatprep.subr.mxu0 0.0
    %930 = vmatpush1.msra.mxu0 0.0
    %931 = vmatprep.subr.mxu0 0.0
    %932 = vmatpush1.msra.mxu0 0.0
    %933 = vmatprep.subr.mxu0 0.0
    %934 = vmatpush1.msra.mxu0 0.0
    %935 = vmatprep.subr.mxu0 0.0
    %936 = vmatpush1.msra.mxu0 0.0
    %937 = vmatprep.subr.mxu0 0.0
    %938 = vmatpush1.msra.mxu0 0.0
    %939 = vmatprep.subr.mxu0 0.0
    %940 = vmatpush1.msra.mxu0 0.0
    %941 = vmatprep.subr.mxu0 0.0
    %942 = vmatpush1.msra.mxu0 0.0
    %943 = vmatprep.subr.mxu0 0.0
    %944 = vmatpush1.msra.mxu0 0.0
    %945 = vmatprep.subr.mxu0 0.0
    %946 = vmatpush1.msra.mxu0 0.0
    %947 = vmatprep.subr.mxu0 0.0
    %948 = vmatpush1.msra.mxu0 0.0
    %949 = vmatprep.subr.mxu0 0.0
    %950 = vmatpush1.msra.mxu0 0.0
    %951 = vmatprep.subr.mxu0 0.0
    %952 = vmatpush1.msra.mxu0 0.0
    %953 = vmatprep.subr.mxu0 0.0
    %954 = vmatpush1.msra.mxu0 0.0
    %955 = vmatprep.subr.mxu0 0.0
    %956 = vmatpush1.msra.mxu0 0.0
    %957 = vmatprep.subr.mxu0 0.0
    %958 = vmatpush1.msra.mxu0 0.0
    %959 = vmatprep.subr.mxu0 0.0
    %960 = vmatpush1.msra.mxu0 0.0
    %961 = vmatprep.subr.mxu0 0.0
    %962 = vmatpush1.msra.mxu0 0.0
    %963 = vmatprep.subr.mxu0 0.0
    %964 = vmatpush1.msra.mxu0 0.0
    %965 = vmatprep.subr.mxu0 0.0
    %966 = vmatpush1.msra.mxu0 0.0
    %967 = vmatprep.subr.mxu0 0.0
    %968 = vmatpush1.msra.mxu0 0.0
    %969 = vmatprep.subr.mxu0 0.0
    %970 = vmatpush1.msra.mxu0 0.0
    %971 = vmatprep.subr.mxu0 0.0
    %972 = vmatpush1.msra.mxu0 0.0
    %973 = vmatprep.mubr.f32.mxu0 0.0
    %974 = vmatmul.mubr.f32.gmra.mrb[0].mxu0 %v827
    %v975 = vpop.f32.mrb[0].mxu0
    %v976 = vadd.f32 0.0, %v975
    %v977 = vpop.f32.mrb[0].mxu0
    %v978 = vadd.f32 0.0, %v977
    %979 = vmatprep.mubr.f32.mxu0 0.0
    %980 = vmatmul.mubr.f32.gmra.mrb[0].mxu0 %v830
    %v981 = vpop.f32.mrb[0].mxu0
    %v982 = vadd.f32 0.0, %v981
    %v983 = vpop.f32.mrb[0].mxu0
    %v984 = vadd.f32 0.0, %v983
    %985 = vdwg.mxu0
    %986 = vmatprep.subr.mxu0 %v764
    %987 = vmatpush1.msra.mxu0 %v763
    %988 = vmatprep.subr.mxu0 %v772
    %989 = vmatpush1.msra.mxu0 %v771
    %990 = vmatprep.subr.mxu0 %v780
    %991 = vmatpush1.msra.mxu0 %v779
    %992 = vmatprep.subr.mxu0 %v788
    %993 = vmatpush1.msra.mxu0 %v787
    %994 = vmatprep.subr.mxu0 %v796
    %995 = vmatpush1.msra.mxu0 %v795
    %996 = vmatprep.subr.mxu0 %v804
    %997 = vmatpush1.msra.mxu0 %v803
    %998 = vmatprep.subr.mxu0 %v812
    %999 = vmatpush1.msra.mxu0 %v811
    %1000 = vmatprep.subr.mxu0 %v820
    %1001 = vmatpush1.msra.mxu0 %v819
    %1002 = vmatprep.subr.mxu0 0.0
    %1003 = vmatpush1.msra.mxu0 0.0
    %1004 = vmatprep.subr.mxu0 0.0
    %1005 = vmatpush1.msra.mxu0 0.0
    %1006 = vmatprep.subr.mxu0 0.0
    %1007 = vmatpush1.msra.mxu0 0.0
    %1008 = vmatprep.subr.mxu0 0.0
    %1009 = vmatpush1.msra.mxu0 0.0
    %1010 = vmatprep.subr.mxu0 0.0
    %1011 = vmatpush1.msra.mxu0 0.0
    %1012 = vmatprep.subr.mxu0 0.0
    %1013 = vmatpush1.msra.mxu0 0.0
    %1014 = vmatprep.subr.mxu0 0.0
    %1015 = vmatpush1.msra.mxu0 0.0
    %1016 = vmatprep.subr.mxu0 0.0
    %1017 = vmatpush1.msra.mxu0 0.0
    %1018 = vmatprep.subr.mxu0 0.0
    %1019 = vmatpush1.msra.mxu0 0.0
    %1020 = vmatprep.subr.mxu0 0.0
    %1021 = vmatpush1.msra.mxu0 0.0
    %1022 = vmatprep.subr.mxu0 0.0
    %1023 = vmatpush1.msra.mxu0 0.0
    %1024 = vmatprep.subr.mxu0 0.0
    %1025 = vmatpush1.msra.mxu0 0.0
    %1026 = vmatprep.subr.mxu0 0.0
    %1027 = vmatpush1.msra.mxu0 0.0
    %1028 = vmatprep.subr.mxu0 0.0
    %1029 = vmatpush1.msra.mxu0 0.0
    %1030 = vmatprep.subr.mxu0 0.0
    %1031 = vmatpush1.msra.mxu0 0.0
    %1032 = vmatprep.subr.mxu0 0.0
    %1033 = vmatpush1.msra.mxu0 0.0
    %1034 = vmatprep.subr.mxu0 0.0
    %1035 = vmatpush1.msra.mxu0 0.0
    %1036 = vmatprep.subr.mxu0 0.0
    %1037 = vmatpush1.msra.mxu0 0.0
    %1038 = vmatprep.subr.mxu0 0.0
    %1039 = vmatpush1.msra.mxu0 0.0
    %1040 = vmatprep.subr.mxu0 0.0
    %1041 = vmatpush1.msra.mxu0 0.0
    %1042 = vmatprep.subr.mxu0 0.0
    %1043 = vmatpush1.msra.mxu0 0.0
    %1044 = vmatprep.subr.mxu0 0.0
    %1045 = vmatpush1.msra.mxu0 0.0
    %1046 = vmatprep.subr.mxu0 0.0
    %1047 = vmatpush1.msra.mxu0 0.0
    %1048 = vmatprep.subr.mxu0 0.0
    %1049 = vmatpush1.msra.mxu0 0.0
    %1050 = vmatprep.mubr.f32.mxu0 0.0
    %1051 = vmatmul.mubr.f32.gmra.mrb[0].mxu0 %v827
    %v1052 = vpop.f32.mrb[0].mxu0
    %v1053 = vadd.f32 0.0, %v1052
    %v1054 = vpop.f32.mrb[0].mxu0
    %v1055 = vadd.f32 0.0, %v1054
    %1056 = vmatprep.mubr.f32.mxu0 0.0
    %1057 = vmatmul.mubr.f32.gmra.mrb[0].mxu0 %v830
    %v1058 = vpop.f32.mrb[0].mxu0
    %v1059 = vadd.f32 0.0, %v1058
    %v1060 = vpop.f32.mrb[0].mxu0
    %v1061 = vadd.f32 0.0, %v1060
    %1062 = vdwg.mxu0
    %1063 = vmatprep.subr.mxu0 %v766
    %1064 = vmatpush1.msra.mxu0 %v765
    %1065 = vmatprep.subr.mxu0 %v774
    %1066 = vmatpush1.msra.mxu0 %v773
    %1067 = vmatprep.subr.mxu0 %v782
    %1068 = vmatpush1.msra.mxu0 %v781
    %1069 = vmatprep.subr.mxu0 %v790
    %1070 = vmatpush1.msra.mxu0 %v789
    %1071 = vmatprep.subr.mxu0 %v798
    %1072 = vmatpush1.msra.mxu0 %v797
    %1073 = vmatprep.subr.mxu0 %v806
    %1074 = vmatpush1.msra.mxu0 %v805
    %1075 = vmatprep.subr.mxu0 %v814
    %1076 = vmatpush1.msra.mxu0 %v813
    %1077 = vmatprep.subr.mxu0 %v822
    %1078 = vmatpush1.msra.mxu0 %v821
    %1079 = vmatprep.subr.mxu0 0.0
    %1080 = vmatpush1.msra.mxu0 0.0
    %1081 = vmatprep.subr.mxu0 0.0
    %1082 = vmatpush1.msra.mxu0 0.0
    %1083 = vmatprep.subr.mxu0 0.0
    %1084 = vmatpush1.msra.mxu0 0.0
    %1085 = vmatprep.subr.mxu0 0.0
    %1086 = vmatpush1.msra.mxu0 0.0
    %1087 = vmatprep.subr.mxu0 0.0
    %1088 = vmatpush1.msra.mxu0 0.0
    %1089 = vmatprep.subr.mxu0 0.0
    %1090 = vmatpush1.msra.mxu0 0.0
    %1091 = vmatprep.subr.mxu0 0.0
    %1092 = vmatpush1.msra.mxu0 0.0
    %1093 = vmatprep.subr.mxu0 0.0
    %1094 = vmatpush1.msra.mxu0 0.0
    %1095 = vmatprep.subr.mxu0 0.0
    %1096 = vmatpush1.msra.mxu0 0.0
    %1097 = vmatprep.subr.mxu0 0.0
    %1098 = vmatpush1.msra.mxu0 0.0
    %1099 = vmatprep.subr.mxu0 0.0
    %1100 = vmatpush1.msra.mxu0 0.0
    %1101 = vmatprep.subr.mxu0 0.0
    %1102 = vmatpush1.msra.mxu0 0.0
    %1103 = vmatprep.subr.mxu0 0.0
    %1104 = vmatpush1.msra.mxu0 0.0
    %1105 = vmatprep.subr.mxu0 0.0
    %1106 = vmatpush1.msra.mxu0 0.0
    %1107 = vmatprep.subr.mxu0 0.0
    %1108 = vmatpush1.msra.mxu0 0.0
    %1109 = vmatprep.subr.mxu0 0.0
    %1110 = vmatpush1.msra.mxu0 0.0
    %1111 = vmatprep.subr.mxu0 0.0
    %1112 = vmatpush1.msra.mxu0 0.0
    %1113 = vmatprep.subr.mxu0 0.0
    %1114 = vmatpush1.msra.mxu0 0.0
    %1115 = vmatprep.subr.mxu0 0.0
    %1116 = vmatpush1.msra.mxu0 0.0
    %1117 = vmatprep.subr.mxu0 0.0
    %1118 = vmatpush1.msra.mxu0 0.0
    %1119 = vmatprep.subr.mxu0 0.0
    %1120 = vmatpush1.msra.mxu0 0.0
    %1121 = vmatprep.subr.mxu0 0.0
    %1122 = vmatpush1.msra.mxu0 0.0
    %1123 = vmatprep.subr.mxu0 0.0
    %1124 = vmatpush1.msra.mxu0 0.0
    %1125 = vmatprep.subr.mxu0 0.0
    %1126 = vmatpush1.msra.mxu0 0.0
    %1127 = vmatprep.mubr.f32.mxu0 0.0
    %1128 = vmatmul.mubr.f32.gmra.mrb[0].mxu0 %v827
    %v1129 = vpop.f32.mrb[0].mxu0
    %v1130 = vadd.f32 0.0, %v1129
    %v1131 = vpop.f32.mrb[0].mxu0
    %v1132 = vadd.f32 0.0, %v1131
    %1133 = vmatprep.mubr.f32.mxu0 0.0
    %1134 = vmatmul.mubr.f32.gmra.mrb[0].mxu0 %v830
    %v1135 = vpop.f32.mrb[0].mxu0
    %v1136 = vadd.f32 0.0, %v1135
    %v1137 = vpop.f32.mrb[0].mxu0
    %v1138 = vadd.f32 0.0, %v1137
    %1139 = vdwg.mxu0
    %v1140 = vmax.f32 %v899, 0.0
    %v1141 = vmax.f32 %v901, 0.0
    %v1142 = vmax.f32 %v976, 0.0
    %v1143 = vmax.f32 %v978, 0.0
    %v1144 = vmax.f32 %v1053, 0.0
    %v1145 = vmax.f32 %v1055, 0.0
    %v1146 = vmax.f32 %v1130, 0.0
    %v1147 = vmax.f32 %v1132, 0.0
    %v1148 = vmax.f32 %v905, 0.0
    %v1149 = vmax.f32 %v907, 0.0
    %v1150 = vmax.f32 %v982, 0.0
    %v1151 = vmax.f32 %v984, 0.0
    %v1152 = vmax.f32 %v1059, 0.0
    %v1153 = vmax.f32 %v1061, 0.0
    %v1154 = vmax.f32 %v1136, 0.0
    %v1155 = vmax.f32 %v1138, 0.0
    %v1156 = vld [vmem:[%s5] sm:$0xff]
    %v1157 = vld [vmem:[%s6] sm:$0xff]
    %1159 = vset.pattern.permute.xlu0 0
    %1160 = vperm.xlu0 %1159, %v1157
    %v1161 = vpop.permute.xlu0 %1160
    %v1164 = vsel %vm58, %v1156, 0
    %1166 = vmatprep.subr.mxu0 %v1141
    %1167 = vmatpush1.msra.mxu0 %v1140
    %1168 = vmatprep.subr.mxu0 %v1149
    %1169 = vmatpush1.msra.mxu0 %v1148
    %1170 = vmatprep.subr.mxu0 0.0
    %1171 = vmatpush1.msra.mxu0 0.0
    %1172 = vmatprep.subr.mxu0 0.0
    %1173 = vmatpush1.msra.mxu0 0.0
    %1174 = vmatprep.subr.mxu0 0.0
    %1175 = vmatpush1.msra.mxu0 0.0
    %1176 = vmatprep.subr.mxu0 0.0
    %1177 = vmatpush1.msra.mxu0 0.0
    %1178 = vmatprep.subr.mxu0 0.0
    %1179 = vmatpush1.msra.mxu0 0.0
    %1180 = vmatprep.subr.mxu0 0.0
    %1181 = vmatpush1.msra.mxu0 0.0
    %1182 = vmatprep.subr.mxu0 0.0
    %1183 = vmatpush1.msra.mxu0 0.0
    %1184 = vmatprep.subr.mxu0 0.0
    %1185 = vmatpush1.msra.mxu0 0.0
    %1186 = vmatprep.subr.mxu0 0.0
    %1187 = vmatpush1.msra.mxu0 0.0
    %1188 = vmatprep.subr.mxu0 0.0
    %1189 = vmatpush1.msra.mxu0 0.0
    %1190 = vmatprep.subr.mxu0 0.0
    %1191 = vmatpush1.msra.mxu0 0.0
    %1192 = vmatprep.subr.mxu0 0.0
    %1193 = vmatpush1.msra.mxu0 0.0
    %1194 = vmatprep.subr.mxu0 0.0
    %1195 = vmatpush1.msra.mxu0 0.0
    %1196 = vmatprep.subr.mxu0 0.0
    %1197 = vmatpush1.msra.mxu0 0.0
    %1198 = vmatprep.subr.mxu0 0.0
    %1199 = vmatpush1.msra.mxu0 0.0
    %1200 = vmatprep.subr.mxu0 0.0
    %1201 = vmatpush1.msra.mxu0 0.0
    %1202 = vmatprep.subr.mxu0 0.0
    %1203 = vmatpush1.msra.mxu0 0.0
    %1204 = vmatprep.subr.mxu0 0.0
    %1205 = vmatpush1.msra.mxu0 0.0
    %1206 = vmatprep.subr.mxu0 0.0
    %1207 = vmatpush1.msra.mxu0 0.0
    %1208 = vmatprep.subr.mxu0 0.0
    %1209 = vmatpush1.msra.mxu0 0.0
    %1210 = vmatprep.subr.mxu0 0.0
    %1211 = vmatpush1.msra.mxu0 0.0
    %1212 = vmatprep.subr.mxu0 0.0
    %1213 = vmatpush1.msra.mxu0 0.0
    %1214 = vmatprep.subr.mxu0 0.0
    %1215 = vmatpush1.msra.mxu0 0.0
    %1216 = vmatprep.subr.mxu0 0.0
    %1217 = vmatpush1.msra.mxu0 0.0
    %1218 = vmatprep.subr.mxu0 0.0
    %1219 = vmatpush1.msra.mxu0 0.0
    %1220 = vmatprep.subr.mxu0 0.0
    %1221 = vmatpush1.msra.mxu0 0.0
    %1222 = vmatprep.subr.mxu0 0.0
    %1223 = vmatpush1.msra.mxu0 0.0
    %1224 = vmatprep.subr.mxu0 0.0
    %1225 = vmatpush1.msra.mxu0 0.0
    %1226 = vmatprep.subr.mxu0 0.0
    %1227 = vmatpush1.msra.mxu0 0.0
    %1228 = vmatprep.subr.mxu0 0.0
    %1229 = vmatpush1.msra.mxu0 0.0
    %1230 = vmatprep.mubr.f32.mxu0 0.0
    %1231 = vmatmul.mubr.f32.gmra.mrb[0].mxu0 %v1164
    %v1232 = vpop.f32.mrb[0].mxu0
    %v1233 = vadd.f32 %v1161, %v1232
    %v1234 = vpop.f32.mrb[0].mxu0
    %v1235 = vadd.f32 %v1161, %v1234
    %1236 = vdwg.mxu0
    %1237 = vmatprep.subr.mxu0 %v1143
    %1238 = vmatpush1.msra.mxu0 %v1142
    %1239 = vmatprep.subr.mxu0 %v1151
    %1240 = vmatpush1.msra.mxu0 %v1150
    %1241 = vmatprep.subr.mxu0 0.0
    %1242 = vmatpush1.msra.mxu0 0.0
    %1243 = vmatprep.subr.mxu0 0.0
    %1244 = vmatpush1.msra.mxu0 0.0
    %1245 = vmatprep.subr.mxu0 0.0
    %1246 = vmatpush1.msra.mxu0 0.0
    %1247 = vmatprep.subr.mxu0 0.0
    %1248 = vmatpush1.msra.mxu0 0.0
    %1249 = vmatprep.subr.mxu0 0.0
    %1250 = vmatpush1.msra.mxu0 0.0
    %1251 = vmatprep.subr.mxu0 0.0
    %1252 = vmatpush1.msra.mxu0 0.0
    %1253 = vmatprep.subr.mxu0 0.0
    %1254 = vmatpush1.msra.mxu0 0.0
    %1255 = vmatprep.subr.mxu0 0.0
    %1256 = vmatpush1.msra.mxu0 0.0
    %1257 = vmatprep.subr.mxu0 0.0
    %1258 = vmatpush1.msra.mxu0 0.0
    %1259 = vmatprep.subr.mxu0 0.0
    %1260 = vmatpush1.msra.mxu0 0.0
    %1261 = vmatprep.subr.mxu0 0.0
    %1262 = vmatpush1.msra.mxu0 0.0
    %1263 = vmatprep.subr.mxu0 0.0
    %1264 = vmatpush1.msra.mxu0 0.0
    %1265 = vmatprep.subr.mxu0 0.0
    %1266 = vmatpush1.msra.mxu0 0.0
    %1267 = vmatprep.subr.mxu0 0.0
    %1268 = vmatpush1.msra.mxu0 0.0
    %1269 = vmatprep.subr.mxu0 0.0
    %1270 = vmatpush1.msra.mxu0 0.0
    %1271 = vmatprep.subr.mxu0 0.0
    %1272 = vmatpush1.msra.mxu0 0.0
    %1273 = vmatprep.subr.mxu0 0.0
    %1274 = vmatpush1.msra.mxu0 0.0
    %1275 = vmatprep.subr.mxu0 0.0
    %1276 = vmatpush1.msra.mxu0 0.0
    %1277 = vmatprep.subr.mxu0 0.0
    %1278 = vmatpush1.msra.mxu0 0.0
    %1279 = vmatprep.subr.mxu0 0.0
    %1280 = vmatpush1.msra.mxu0 0.0
    %1281 = vmatprep.subr.mxu0 0.0
    %1282 = vmatpush1.msra.mxu0 0.0
    %1283 = vmatprep.subr.mxu0 0.0
    %1284 = vmatpush1.msra.mxu0 0.0
    %1285 = vmatprep.subr.mxu0 0.0
    %1286 = vmatpush1.msra.mxu0 0.0
    %1287 = vmatprep.subr.mxu0 0.0
    %1288 = vmatpush1.msra.mxu0 0.0
    %1289 = vmatprep.subr.mxu0 0.0
    %1290 = vmatpush1.msra.mxu0 0.0
    %1291 = vmatprep.subr.mxu0 0.0
    %1292 = vmatpush1.msra.mxu0 0.0
    %1293 = vmatprep.subr.mxu0 0.0
    %1294 = vmatpush1.msra.mxu0 0.0
    %1295 = vmatprep.subr.mxu0 0.0
    %1296 = vmatpush1.msra.mxu0 0.0
    %1297 = vmatprep.subr.mxu0 0.0
    %1298 = vmatpush1.msra.mxu0 0.0
    %1299 = vmatprep.subr.mxu0 0.0
    %1300 = vmatpush1.msra.mxu0 0.0
    %1301 = vmatprep.mubr.f32.mxu0 0.0
    %1302 = vmatmul.mubr.f32.gmra.mrb[0].mxu0 %v1164
    %v1303 = vpop.f32.mrb[0].mxu0
    %v1304 = vadd.f32 %v1161, %v1303
    %v1305 = vpop.f32.mrb[0].mxu0
    %v1306 = vadd.f32 %v1161, %v1305
    %1307 = vdwg.mxu0
    %1308 = vmatprep.subr.mxu0 %v1145
    %1309 = vmatpush1.msra.mxu0 %v1144
    %1310 = vmatprep.subr.mxu0 %v1153
    %1311 = vmatpush1.msra.mxu0 %v1152
    %1312 = vmatprep.subr.mxu0 0.0
    %1313 = vmatpush1.msra.mxu0 0.0
    %1314 = vmatprep.subr.mxu0 0.0
    %1315 = vmatpush1.msra.mxu0 0.0
    %1316 = vmatprep.subr.mxu0 0.0
    %1317 = vmatpush1.msra.mxu0 0.0
    %1318 = vmatprep.subr.mxu0 0.0
    %1319 = vmatpush1.msra.mxu0 0.0
    %1320 = vmatprep.subr.mxu0 0.0
    %1321 = vmatpush1.msra.mxu0 0.0
    %1322 = vmatprep.subr.mxu0 0.0
    %1323 = vmatpush1.msra.mxu0 0.0
    %1324 = vmatprep.subr.mxu0 0.0
    %1325 = vmatpush1.msra.mxu0 0.0
    %1326 = vmatprep.subr.mxu0 0.0
    %1327 = vmatpush1.msra.mxu0 0.0
    %1328 = vmatprep.subr.mxu0 0.0
    %1329 = vmatpush1.msra.mxu0 0.0
    %1330 = vmatprep.subr.mxu0 0.0
    %1331 = vmatpush1.msra.mxu0 0.0
    %1332 = vmatprep.subr.mxu0 0.0
    %1333 = vmatpush1.msra.mxu0 0.0
    %1334 = vmatprep.subr.mxu0 0.0
    %1335 = vmatpush1.msra.mxu0 0.0
    %1336 = vmatprep.subr.mxu0 0.0
    %1337 = vmatpush1.msra.mxu0 0.0
    %1338 = vmatprep.subr.mxu0 0.0
    %1339 = vmatpush1.msra.mxu0 0.0
    %1340 = vmatprep.subr.mxu0 0.0
    %1341 = vmatpush1.msra.mxu0 0.0
    %1342 = vmatprep.subr.mxu0 0.0
    %1343 = vmatpush1.msra.mxu0 0.0
    %1344 = vmatprep.subr.mxu0 0.0
    %1345 = vmatpush1.msra.mxu0 0.0
    %1346 = vmatprep.subr.mxu0 0.0
    %1347 = vmatpush1.msra.mxu0 0.0
    %1348 = vmatprep.subr.mxu0 0.0
    %1349 = vmatpush1.msra.mxu0 0.0
    %1350 = vmatprep.subr.mxu0 0.0
    %1351 = vmatpush1.msra.mxu0 0.0
    %1352 = vmatprep.subr.mxu0 0.0
    %1353 = vmatpush1.msra.mxu0 0.0
    %1354 = vmatprep.subr.mxu0 0.0
    %1355 = vmatpush1.msra.mxu0 0.0
    %1356 = vmatprep.subr.mxu0 0.0
    %1357 = vmatpush1.msra.mxu0 0.0
    %1358 = vmatprep.subr.mxu0 0.0
    %1359 = vmatpush1.msra.mxu0 0.0
    %1360 = vmatprep.subr.mxu0 0.0
    %1361 = vmatpush1.msra.mxu0 0.0
    %1362 = vmatprep.subr.mxu0 0.0
    %1363 = vmatpush1.msra.mxu0 0.0
    %1364 = vmatprep.subr.mxu0 0.0
    %1365 = vmatpush1.msra.mxu0 0.0
    %1366 = vmatprep.subr.mxu0 0.0
    %1367 = vmatpush1.msra.mxu0 0.0
    %1368 = vmatprep.subr.mxu0 0.0
    %1369 = vmatpush1.msra.mxu0 0.0
    %1370 = vmatprep.subr.mxu0 0.0
    %1371 = vmatpush1.msra.mxu0 0.0
    %1372 = vmatprep.mubr.f32.mxu0 0.0
    %1373 = vmatmul.mubr.f32.gmra.mrb[0].mxu0 %v1164
    %v1374 = vpop.f32.mrb[0].mxu0
    %v1375 = vadd.f32 %v1161, %v1374
    %v1376 = vpop.f32.mrb[0].mxu0
    %v1377 = vadd.f32 %v1161, %v1376
    %1378 = vdwg.mxu0
    %1379 = vmatprep.subr.mxu0 %v1147
    %1380 = vmatpush1.msra.mxu0 %v1146
    %1381 = vmatprep.subr.mxu0 %v1155
    %1382 = vmatpush1.msra.mxu0 %v1154
    %1383 = vmatprep.subr.mxu0 0.0
    %1384 = vmatpush1.msra.mxu0 0.0
    %1385 = vmatprep.subr.mxu0 0.0
    %1386 = vmatpush1.msra.mxu0 0.0
    %1387 = vmatprep.subr.mxu0 0.0
    %1388 = vmatpush1.msra.mxu0 0.0
    %1389 = vmatprep.subr.mxu0 0.0
    %1390 = vmatpush1.msra.mxu0 0.0
    %1391 = vmatprep.subr.mxu0 0.0
    %1392 = vmatpush1.msra.mxu0 0.0
    %1393 = vmatprep.subr.mxu0 0.0
    %1394 = vmatpush1.msra.mxu0 0.0
    %1395 = vmatprep.subr.mxu0 0.0
    %1396 = vmatpush1.msra.mxu0 0.0
    %1397 = vmatprep.subr.mxu0 0.0
    %1398 = vmatpush1.msra.mxu0 0.0
    %1399 = vmatprep.subr.mxu0 0.0
    %1400 = vmatpush1.msra.mxu0 0.0
    %1401 = vmatprep.subr.mxu0 0.0
    %1402 = vmatpush1.msra.mxu0 0.0
    %1403 = vmatprep.subr.mxu0 0.0
    %1404 = vmatpush1.msra.mxu0 0.0
    %1405 = vmatprep.subr.mxu0 0.0
    %1406 = vmatpush1.msra.mxu0 0.0
    %1407 = vmatprep.subr.mxu0 0.0
    %1408 = vmatpush1.msra.mxu0 0.0
    %1409 = vmatprep.subr.mxu0 0.0
    %1410 = vmatpush1.msra.mxu0 0.0
    %1411 = vmatprep.subr.mxu0 0.0
    %1412 = vmatpush1.msra.mxu0 0.0
    %1413 = vmatprep.subr.mxu0 0.0
    %1414 = vmatpush1.msra.mxu0 0.0
    %1415 = vmatprep.subr.mxu0 0.0
    %1416 = vmatpush1.msra.mxu0 0.0
    %1417 = vmatprep.subr.mxu0 0.0
    %1418 = vmatpush1.msra.mxu0 0.0
    %1419 = vmatprep.subr.mxu0 0.0
    %1420 = vmatpush1.msra.mxu0 0.0
    %1421 = vmatprep.subr.mxu0 0.0
    %1422 = vmatpush1.msra.mxu0 0.0
    %1423 = vmatprep.subr.mxu0 0.0
    %1424 = vmatpush1.msra.mxu0 0.0
    %1425 = vmatprep.subr.mxu0 0.0
    %1426 = vmatpush1.msra.mxu0 0.0
    %1427 = vmatprep.subr.mxu0 0.0
    %1428 = vmatpush1.msra.mxu0 0.0
    %1429 = vmatprep.subr.mxu0 0.0
    %1430 = vmatpush1.msra.mxu0 0.0
    %1431 = vmatprep.subr.mxu0 0.0
    %1432 = vmatpush1.msra.mxu0 0.0
    %1433 = vmatprep.subr.mxu0 0.0
    %1434 = vmatpush1.msra.mxu0 0.0
    %1435 = vmatprep.subr.mxu0 0.0
    %1436 = vmatpush1.msra.mxu0 0.0
    %1437 = vmatprep.subr.mxu0 0.0
    %1438 = vmatpush1.msra.mxu0 0.0
    %1439 = vmatprep.subr.mxu0 0.0
    %1440 = vmatpush1.msra.mxu0 0.0
    %1441 = vmatprep.subr.mxu0 0.0
    %1442 = vmatpush1.msra.mxu0 0.0
    %1443 = vmatprep.mubr.f32.mxu0 0.0
    %1444 = vmatmul.mubr.f32.gmra.mrb[0].mxu0 %v1164
    %v1445 = vpop.f32.mrb[0].mxu0
    %v1446 = vadd.f32 %v1161, %v1445
    %v1447 = vpop.f32.mrb[0].mxu0
    %v1448 = vadd.f32 %v1161, %v1447
    %1449 = vdwg.mxu0
    %v1450 = vmax.f32 %v1233, 0.0
    %v1451 = vmax.f32 %v1235, 0.0
    %v1452 = vmax.f32 %v1304, 0.0
    %v1453 = vmax.f32 %v1306, 0.0
    %v1454 = vmax.f32 %v1375, 0.0
    %v1455 = vmax.f32 %v1377, 0.0
    %v1456 = vmax.f32 %v1446, 0.0
    %v1457 = vmax.f32 %v1448, 0.0
    %v1458 = vld [vmem:[%s7] sm:$0xff]
    %1460 = vset.pattern.permute.xlu0 0
    %1461 = vperm.xlu0 %1460, %v1458
    %v1462 = vpop.permute.xlu0 %1461
    %v1464 = vmul.f32 %v1450, %v1462
    %v1465 = vmul.f32 %v1451, %v1462
    %v1466 = vmul.f32 %v1452, %v1462
    %v1467 = vmul.f32 %v1453, %v1462
    %v1468 = vmul.f32 %v1454, %v1462
    %v1469 = vmul.f32 %v1455, %v1462
    %v1470 = vmul.f32 %v1456, %v1462
    %v1471 = vmul.f32 %v1457, %v1462
    %v1472 = vrot.slane %v1464, 4
    %v1473 = vadd.f32 %v1464, %v1472
    %v1474 = vrot.slane %v1473, 2
    %v1475 = vadd.f32 %v1473, %v1474
    %v1476 = vrot.slane %v1475, 1
    %v1477 = vadd.f32 %v1475, %v1476
    %v1478 = vrot.slane %v1465, 4
    %v1479 = vadd.f32 %v1465, %v1478
    %v1480 = vrot.slane %v1479, 2
    %v1481 = vadd.f32 %v1479, %v1480
    %v1482 = vrot.slane %v1481, 1
    %v1483 = vadd.f32 %v1481, %v1482
    %v1484 = vrot.slane %v1466, 4
    %v1485 = vadd.f32 %v1466, %v1484
    %v1486 = vrot.slane %v1485, 2
    %v1487 = vadd.f32 %v1485, %v1486
    %v1488 = vrot.slane %v1487, 1
    %v1489 = vadd.f32 %v1487, %v1488
    %v1490 = vrot.slane %v1467, 4
    %v1491 = vadd.f32 %v1467, %v1490
    %v1492 = vrot.slane %v1491, 2
    %v1493 = vadd.f32 %v1491, %v1492
    %v1494 = vrot.slane %v1493, 1
    %v1495 = vadd.f32 %v1493, %v1494
    %v1496 = vrot.slane %v1468, 4
    %v1497 = vadd.f32 %v1468, %v1496
    %v1498 = vrot.slane %v1497, 2
    %v1499 = vadd.f32 %v1497, %v1498
    %v1500 = vrot.slane %v1499, 1
    %v1501 = vadd.f32 %v1499, %v1500
    %v1502 = vrot.slane %v1469, 4
    %v1503 = vadd.f32 %v1469, %v1502
    %v1504 = vrot.slane %v1503, 2
    %v1505 = vadd.f32 %v1503, %v1504
    %v1506 = vrot.slane %v1505, 1
    %v1507 = vadd.f32 %v1505, %v1506
    %v1508 = vrot.slane %v1470, 4
    %v1509 = vadd.f32 %v1470, %v1508
    %v1510 = vrot.slane %v1509, 2
    %v1511 = vadd.f32 %v1509, %v1510
    %v1512 = vrot.slane %v1511, 1
    %v1513 = vadd.f32 %v1511, %v1512
    %v1514 = vrot.slane %v1471, 4
    %v1515 = vadd.f32 %v1471, %v1514
    %v1516 = vrot.slane %v1515, 2
    %v1517 = vadd.f32 %v1515, %v1516
    %v1518 = vrot.slane %v1517, 1
    %v1519 = vadd.f32 %v1517, %v1518
    %s1520 = sld [smem:[#allocation2]]
    %v1521 = vstv %s1520
    %v1522 = vadd.f32 %v1477, %v1521
    %v1523 = vadd.f32 %v1483, %v1521
    %v1524 = vadd.f32 %v1489, %v1521
    %v1525 = vadd.f32 %v1495, %v1521
    %v1526 = vadd.f32 %v1501, %v1521
    %v1527 = vadd.f32 %v1507, %v1521
    %v1528 = vadd.f32 %v1513, %v1521
    %v1529 = vadd.f32 %v1519, %v1521
    %v1530 = vsub.f32 0.0, %v1522
    %v1531 = vsub.f32 0.0, %v1523
    %v1532 = vsub.f32 0.0, %v1524
    %v1533 = vsub.f32 0.0, %v1525
    %v1534 = vsub.f32 0.0, %v1526
    %v1535 = vsub.f32 0.0, %v1527
    %v1536 = vsub.f32 0.0, %v1528
    %v1537 = vsub.f32 0.0, %v1529
    %v1538 = vmul.f32 %v1530, 1.442695
    %v1539 = vpow.pop %v1538
    %v1540 = vmul.f32 %v1531, 1.442695
    %v1541 = vpow.pop %v1540
    %v1542 = vmul.f32 %v1532, 1.442695
    %v1543 = vpow.pop %v1542
    %v1544 = vmul.f32 %v1533, 1.442695
    %v1545 = vpow.pop %v1544
    %v1546 = vmul.f32 %v1534, 1.442695
    %v1547 = vpow.pop %v1546
    %v1548 = vmul.f32 %v1535, 1.442695
    %v1549 = vpow.pop %v1548
    %v1550 = vmul.f32 %v1536, 1.442695
    %v1551 = vpow.pop %v1550
    %v1552 = vmul.f32 %v1537, 1.442695
    %v1553 = vpow.pop %v1552
    %v1554 = vadd.f32 %v1539, 1.0
    %v1555 = vadd.f32 %v1541, 1.0
    %v1556 = vadd.f32 %v1543, 1.0
    %v1557 = vadd.f32 %v1545, 1.0
    %v1558 = vadd.f32 %v1547, 1.0
    %v1559 = vadd.f32 %v1549, 1.0
    %v1560 = vadd.f32 %v1551, 1.0
    %v1561 = vadd.f32 %v1553, 1.0
    %v1562 = vrcp.pop %v1554
    %v1563 = vrcp.pop %v1555
    %v1564 = vrcp.pop %v1556
    %v1565 = vrcp.pop %v1557
    %v1566 = vrcp.pop %v1558
    %v1567 = vrcp.pop %v1559
    %v1568 = vrcp.pop %v1560
    %v1569 = vrcp.pop %v1561
    %v1578 = vcombine.low %v1562, %v1563
    %v1579 = vcombine.low %v1564, %v1565
    %v1580 = vcombine.low %v1566, %v1567
    %v1581 = vcombine.low %v1568, %v1569
    %v1583 = vunpack.c.l.s4 1966171168
    %v1584 = vunpack.c.0.s8 %v1583
    %v1585 = vlaneseq
    %v1586 = vshrl.u32 %v1585, 7
    %v1587 = vsub.s32 %v1584, %v1586
    %v1588 = vrot.slane %v1578, %v1587
    %v1590 = vunpack.c.l.s4 1966171168
    %v1591 = vunpack.c.0.s8 %v1590
    %v1592 = vlaneseq
    %v1593 = vshrl.u32 %v1592, 7
    %v1594 = vsub.s32 %v1591, %v1593
    %v1595 = vrot.slane %v1579, %v1594
    %v1597 = vunpack.c.l.s4 1966171168
    %v1598 = vunpack.c.0.s8 %v1597
    %v1599 = vlaneseq
    %v1600 = vshrl.u32 %v1599, 7
    %v1601 = vsub.s32 %v1598, %v1600
    %v1602 = vrot.slane %v1580, %v1601
    %v1604 = vunpack.c.l.s4 1966171168
    %v1605 = vunpack.c.0.s8 %v1604
    %v1606 = vlaneseq
    %v1607 = vshrl.u32 %v1606, 7
    %v1608 = vsub.s32 %v1605, %v1607
    %v1609 = vrot.slane %v1581, %v1608
    %v1610 = vcombine.low %v1588, %v1595
    %v1611 = vcombine.low %v1602, %v1609
    %v1613 = vunpack.c.l.s4 1966171168
    %v1614 = vunpack.c.0.s8 %v1613
    %v1615 = vlaneseq
    %v1616 = vshrl.u32 %v1615, 7
    %v1617 = vsub.s32 %v1614, %v1616
    %v1618 = vrot.slane %v1610, %v1617
    %v1620 = vunpack.c.l.s4 1966171168
    %v1621 = vunpack.c.0.s8 %v1620
    %v1622 = vlaneseq
    %v1623 = vshrl.u32 %v1622, 7
    %v1624 = vsub.s32 %v1621, %v1623
    %v1625 = vrot.slane %v1611, %v1624
    %v1626 = vcombine.low %v1618, %v1625
    %1628 = vst [vmem:[#allocation3] sm:$0xff] %v1626
    // Predicated region
    $region38: #{tpu_custom_call.1} parent=1 // pred_check
      _
    $region39: #{tpu_custom_call.1} parent=1 // pred_check_branch
      %1630 = sbr.rel (0) target = $region41
    $region40: #{tpu_custom_call.1} parent=1 // pred_region
      %s1632 = ssub.s32 128, 128
      %1633 = vsyncadd [#allocation4], %s1632
      %s1635 = sshll.u32 [#allocation3], 4
      %s1636 = int_to_ptr.vmem [resolvable:$true] %s1635
      %1638 = dma.vmem_to_hbm [thread:$0]  %s1636, 128, %s9, [#allocation4]
    $region41: #{tpu_custom_call.1} parent=1 // pred_fallthru
      _
    // Predicated region
    $region42: #{tpu_custom_call.1} parent=1 // pred_check
      _
    $region43: #{tpu_custom_call.1} parent=1 // pred_check_branch
      %1640 = sbr.rel (0) target = $region45
    $region44: #{tpu_custom_call.1} parent=1 // pred_region
      %1641 = dma.done [#allocation4], 128
    $region45: #{tpu_custom_call.1} parent=1 // pred_fallthru
      _
    %1642 = vsyncpa [#allocation4], 1

</llo_original>
